<compile_context>
chip_gen: v6e
topology: v6e:2x2x1
jax: 0.10.0
libtpu: 0.0.40
codegen_flags: <defaults>
</compile_context>

<pallas_src>
import jax
import jax.numpy as jnp
from jax.experimental import pallas as pl
from jax.experimental.pallas import tpu as pltpu

IMAGE_DIM = 28 * 28              # 784
NUM_CLASSES = 10
D_IN = IMAGE_DIM + NUM_CLASSES   # 794
H1 = 512
H2 = 256
D_OUT = 1

MAX_TB = 1024                    # max batch-tile rows per grid step
TB_ALIGN = 16                    # bf16 sublane packing alignment for batch tile
VMEM_LIMIT_BYTES = 32 * 1024 * 1024   # v5e scoped default (16 MiB) is too small for TB=1024


def _cdiv(a, b):
    return -(-a // b)


def _round_up(x, m):
    return ((x + m - 1) // m) * m


def _tensorcores_per_chip():
    """Heuristic megacore gate: v7x has 2 TensorCores/chip, v5e/v6e have 1.
    A wrong answer here only affects perf (grid split), never correctness."""
    try:
        kind = jax.devices()[0].device_kind.lower()
    except Exception:
        return 1
    return 2 if "v7" in kind else 1


_MIN_TILES = _tensorcores_per_chip()


def _leaky_relu(x, slope=0.2):
    return jnp.where(x > 0, x, slope * x)


def discriminator_kernel(img_ref, lbl_ref, w1i_ref, w1l_ref, b1_ref,
                         w2_ref, b2_ref, w3_ref, b3_ref, out_ref):
    # img_ref: (TB, 784) f32/bf16   lbl_ref: (TB, 10) f32
    # w1i_ref: (784, 512) bf16      w1l_ref: (10, 512) bf16   b1_ref: (1, 512) f32
    # w2_ref:  (512, 256) bf16      b2_ref:  (1, 256) f32
    # w3_ref:  (1, 256) f32 (last layer, transposed)  b3_ref: (1, 1) f32 (SMEM)
    # out_ref: (TB, 1) f32
    x_img = img_ref[...].astype(jnp.bfloat16)   # no-op if img already bf16
    x_lbl = lbl_ref[...].astype(jnp.bfloat16)

    h1 = (jnp.dot(x_img, w1i_ref[...], preferred_element_type=jnp.float32)
          + jnp.dot(x_lbl, w1l_ref[...], preferred_element_type=jnp.float32)
          + b1_ref[...])
    h1 = _leaky_relu(h1)

    h2 = jnp.dot(h1.astype(jnp.bfloat16), w2_ref[...],
                 preferred_element_type=jnp.float32) + b2_ref[...]
    h2 = _leaky_relu(h2)

    # Final N=1 layer on the VPU (mul) + XLU (lane reduction); stays f32.
    logit = jnp.sum(h2 * w3_ref[...], axis=-1, keepdims=True) + b3_ref[0, 0]
    out_ref[...] = jax.nn.sigmoid(logit)


def pack_params(params):
    """One-time packing of PyTorch-layout f32 params into kernel layout.
    Done at init, NOT inside the forward path (no per-call pad/cast traffic)."""
    emb_table, w1, b1, w2, b2, w3, b3 = params
    w1_img = w1[:IMAGE_DIM].astype(jnp.bfloat16)   # (784, 512)
    w1_lbl = w1[IMAGE_DIM:].astype(jnp.bfloat16)   # (10, 512)
    w2_bf = w2.astype(jnp.bfloat16)                # (512, 256)
    w3_row = w3.T.astype(jnp.float32)              # (1, 256)
    return (emb_table, w1_img, w1_lbl, b1, w2_bf, b2, w3_row, b3)


def _pick_tiling(B):
    """n_tiles first, then the per-tile size -- avoids the old padding cliff
    (B=520 used to pad to 1024 rows; now pads to 528)."""
    n_tiles = max(1, _cdiv(B, MAX_TB))
    # On v7x make sure there are >= 2 grid steps (one per TensorCore) once the
    # batch is big enough that splitting is worthwhile (>= 128 rows per core).
    if _MIN_TILES > 1 and B >= _MIN_TILES * 128:
        n_tiles = max(n_tiles, _MIN_TILES)
    tb = _round_up(_cdiv(B, n_tiles), TB_ALIGN)
    b_pad = n_tiles * tb
    return n_tiles, tb, b_pad


@jax.jit
def discriminator_forward(img, labels, packed):
    """img: (B, 1, 28, 28) float32 (NCHW; bf16 also accepted), labels: (B,) int32."""
    B = img.shape[0]
    emb_table, w1_img, w1_lbl, b1, w2_bf, b2, w3_row, b3 = packed

    img_flat = img.reshape(B, IMAGE_DIM)     # (B, 784) -- free reshape
    # Embedding lookup (gather) stays in the wrapper; XLA fuses it cheaply.
    lbl_emb = emb_table[labels]              # (B, 10)

    n_tiles, tb, b_pad = _pick_tiling(B)
    if b_pad != B:
        img_flat = jnp.pad(img_flat, ((0, b_pad - B), (0, 0)))
        lbl_emb = jnp.pad(lbl_emb, ((0, b_pad - B), (0, 0)))

    flops = 2 * b_pad * (D_IN * H1 + H1 * H2 + H2 * D_OUT)
    bytes_accessed = (
        img_flat.size * img_flat.dtype.itemsize
        + lbl_emb.size * lbl_emb.dtype.itemsize
        + b_pad * D_OUT * 4
        + w1_img.size * 2 + w1_lbl.size * 2 + w2_bf.size * 2
        + (b1.size + b2.size + w3_row.size + b3.size) * 4)

    def const_spec(shape):
        # Weights/biases: same block every grid step -> single-buffered.
        return pl.BlockSpec(shape, lambda i: (0, 0), pipeline_mode=pl.Buffered(1))

    out = pl.pallas_call(
        discriminator_kernel,
        out_shape=jax.ShapeDtypeStruct((b_pad, D_OUT), jnp.float32),
        grid=(n_tiles,),
        in_specs=[
            pl.BlockSpec((tb, IMAGE_DIM), lambda i: (i, 0)),       # img tile
            pl.BlockSpec((tb, NUM_CLASSES), lambda i: (i, 0)),     # label tile
            const_spec((IMAGE_DIM, H1)),                           # w1 (img rows)
            const_spec((NUM_CLASSES, H1)),                         # w1 (label rows)
            const_spec((1, H1)),                                   # b1
            const_spec((H1, H2)),                                  # w2
            const_spec((1, H2)),                                   # b2
            const_spec((1, H2)),                                   # w3 row
            pl.BlockSpec(memory_space=pltpu.MemorySpace.SMEM),     # b3 scalar
        ],
        out_specs=pl.BlockSpec((tb, D_OUT), lambda i: (i, 0)),
        compiler_params=pltpu.CompilerParams(
            dimension_semantics=("parallel",),
            vmem_limit_bytes=VMEM_LIMIT_BYTES),
        cost_estimate=pl.CostEstimate(
            flops=flops, transcendentals=b_pad, bytes_accessed=bytes_accessed),
    )(img_flat, lbl_emb, w1_img, w1_lbl, b1, w2_bf, b2, w3_row, b3)
    return out[:B]


def init_params(key):
    """Deterministic init mirroring PyTorch defaults:
       Embedding ~ N(0,1); Linear W,b ~ U(-1/sqrt(fan_in), 1/sqrt(fan_in))."""
    ks = jax.random.split(key, 7)

    emb_table = jax.random.normal(ks[0], (NUM_CLASSES, NUM_CLASSES), jnp.float32)

    def linear(kw, kb, fan_in, fan_out):
        bound = 1.0 / jnp.sqrt(fan_in)
        w = jax.random.uniform(kw, (fan_in, fan_out), jnp.float32, -bound, bound)
        b = jax.random.uniform(kb, (1, fan_out), jnp.float32, -bound, bound)
        return w, b

    w1, b1 = linear(ks[1], ks[2], D_IN, H1)
    w2, b2 = linear(ks[3], ks[4], H1, H2)
    w3, b3 = linear(ks[5], ks[6], H2, D_OUT)
    return (emb_table, w1, b1, w2, b2, w3, b3)


def reference_forward(img, labels, params):
    emb_table, w1, b1, w2, b2, w3, b3 = params
    B = img.shape[0]
    x = jnp.concatenate([img.reshape(B, -1), emb_table[labels]], axis=1)
    h = _leaky_relu(x @ w1 + b1)
    h = _leaky_relu(h @ w2 + b2)
    return jax.nn.sigmoid(h @ w3 + b3)


if __name__ == "__main__":
    key = jax.random.PRNGKey(0)
    k_img, k_lbl, k_par = jax.random.split(key, 3)

    B = 8
    img = jax.random.normal(k_img, (B, 1, 28, 28), jnp.float32)       # NCHW
    labels = jax.random.randint(k_lbl, (B,), 0, NUM_CLASSES, jnp.int32)

    params = init_params(k_par)          # f32 "master" params (PyTorch layout)
    packed = pack_params(params)         # one-time kernel packing (hoisted)

    out = discriminator_forward(img, labels, packed)
    out = jax.block_until_ready(out)

    ref = reference_forward(img, labels, params)
    assert out.shape == (B, 1), out.shape
    # bf16 weights in the two big matmuls -> loosened tolerance vs f32 reference.
    assert jnp.allclose(out, ref, atol=1e-2, rtol=1e-2), (out, ref)
    print("KERNEL_OK")
</pallas_src>

<mosaic_0001>
module attributes {stable_mosaic.version = 11 : i64} {
  func.func @discriminator_kernel(%arg0: i32, %arg1: memref<16x784xf32, #tpu.memory_space<vmem>>, %arg2: memref<16x10xf32, #tpu.memory_space<vmem>>, %arg3: memref<784x512xbf16, #tpu.memory_space<vmem>>, %arg4: memref<10x512xbf16, #tpu.memory_space<vmem>>, %arg5: memref<1x512xf32, #tpu.memory_space<vmem>>, %arg6: memref<512x256xbf16, #tpu.memory_space<vmem>>, %arg7: memref<1x256xf32, #tpu.memory_space<vmem>>, %arg8: memref<1x256xf32, #tpu.memory_space<vmem>>, %arg9: memref<1x1xf32, #tpu.memory_space<smem>>, %arg10: memref<16x1xf32, #tpu.memory_space<vmem>>) attributes {dimension_semantics = [#tpu.dimension_semantics<parallel>], iteration_bounds = array<i64: 1>, scalar_prefetch = 0 : i64, scratch_operands = 0 : i64, tpu.core_type = #tpu.core_type<tc>, window_params = [{transform_indices = @transform_0, window_bounds = array<i64: 16, 784>}, {transform_indices = @transform_1, window_bounds = array<i64: 16, 10>}, {pipeline_mode = #tpu.pipeline_mode<synchronous>, transform_indices = @transform_2, window_bounds = array<i64: 784, 512>}, {pipeline_mode = #tpu.pipeline_mode<synchronous>, transform_indices = @transform_3, window_bounds = array<i64: 10, 512>}, {pipeline_mode = #tpu.pipeline_mode<synchronous>, transform_indices = @transform_4, window_bounds = array<i64: 1, 512>}, {pipeline_mode = #tpu.pipeline_mode<synchronous>, transform_indices = @transform_5, window_bounds = array<i64: 512, 256>}, {pipeline_mode = #tpu.pipeline_mode<synchronous>, transform_indices = @transform_6, window_bounds = array<i64: 1, 256>}, {pipeline_mode = #tpu.pipeline_mode<synchronous>, transform_indices = @transform_7, window_bounds = array<i64: 1, 256>}, {transform_indices = @transform_8, window_bounds = array<i64: 1, 1>}, {transform_indices = @transform_9, window_bounds = array<i64: 16, 1>}]} {
    %c0 = arith.constant 0 : index
    %c0_0 = arith.constant 0 : index
    %0 = vector.load %arg1[%c0, %c0_0] : memref<16x784xf32, #tpu.memory_space<vmem>>, vector<16x784xf32>
    %1 = arith.truncf %0 : vector<16x784xf32> to vector<16x784xbf16>
    %c0_1 = arith.constant 0 : index
    %c0_2 = arith.constant 0 : index
    %2 = vector.load %arg2[%c0_1, %c0_2] : memref<16x10xf32, #tpu.memory_space<vmem>>, vector<16x10xf32>
    %3 = arith.truncf %2 : vector<16x10xf32> to vector<16x10xbf16>
    %c0_3 = arith.constant 0 : index
    %c0_4 = arith.constant 0 : index
    %4 = vector.load %arg3[%c0_3, %c0_4] : memref<784x512xbf16, #tpu.memory_space<vmem>>, vector<784x512xbf16>
    %cst = arith.constant dense<0.000000e+00> : vector<16x512xf32>
    %5 = tpu.matmul %1, %4, %cst {dimension_numbers = #tpu.dot_dimension_numbers<[1], [0], [0], [1], [0, 0, 1, 1], [], []>} : vector<16x784xbf16>, vector<784x512xbf16>, vector<16x512xf32> -> vector<16x512xf32>
    %c0_5 = arith.constant 0 : index
    %c0_6 = arith.constant 0 : index
    %6 = vector.load %arg4[%c0_5, %c0_6] : memref<10x512xbf16, #tpu.memory_space<vmem>>, vector<10x512xbf16>
    %cst_7 = arith.constant dense<0.000000e+00> : vector<16x512xf32>
    %7 = tpu.matmul %3, %6, %cst_7 {dimension_numbers = #tpu.dot_dimension_numbers<[1], [0], [0], [1], [0, 0, 1, 1], [], []>} : vector<16x10xbf16>, vector<10x512xbf16>, vector<16x512xf32> -> vector<16x512xf32>
    %8 = arith.addf %5, %7 : vector<16x512xf32>
    %c0_8 = arith.constant 0 : index
    %c0_9 = arith.constant 0 : index
    %9 = vector.load %arg5[%c0_8, %c0_9] : memref<1x512xf32, #tpu.memory_space<vmem>>, vector<1x512xf32>
    %10 = vector.broadcast %9 : vector<1x512xf32> to vector<16x512xf32>
    %11 = arith.addf %8, %10 : vector<16x512xf32>
    %cst_10 = arith.constant 0.000000e+00 : f32
    %12 = vector.broadcast %cst_10 : f32 to vector<16x512xf32>
    %13 = arith.cmpf ogt, %11, %12 : vector<16x512xf32>
    %cst_11 = arith.constant 2.000000e-01 : f32
    %14 = vector.broadcast %cst_11 : f32 to vector<16x512xf32>
    %15 = arith.mulf %14, %11 : vector<16x512xf32>
    %16 = arith.select %13, %11, %15 : vector<16x512xi1>, vector<16x512xf32>
    %17 = arith.truncf %16 : vector<16x512xf32> to vector<16x512xbf16>
    %c0_12 = arith.constant 0 : index
    %c0_13 = arith.constant 0 : index
    %18 = vector.load %arg6[%c0_12, %c0_13] : memref<512x256xbf16, #tpu.memory_space<vmem>>, vector<512x256xbf16>
    %cst_14 = arith.constant dense<0.000000e+00> : vector<16x256xf32>
    %19 = tpu.matmul %17, %18, %cst_14 {dimension_numbers = #tpu.dot_dimension_numbers<[1], [0], [0], [1], [0, 0, 1, 1], [], []>} : vector<16x512xbf16>, vector<512x256xbf16>, vector<16x256xf32> -> vector<16x256xf32>
    %c0_15 = arith.constant 0 : index
    %c0_16 = arith.constant 0 : index
    %20 = vector.load %arg7[%c0_15, %c0_16] : memref<1x256xf32, #tpu.memory_space<vmem>>, vector<1x256xf32>
    %21 = vector.broadcast %20 : vector<1x256xf32> to vector<16x256xf32>
    %22 = arith.addf %19, %21 : vector<16x256xf32>
    %cst_17 = arith.constant 0.000000e+00 : f32
    %23 = vector.broadcast %cst_17 : f32 to vector<16x256xf32>
    %24 = arith.cmpf ogt, %22, %23 : vector<16x256xf32>
    %cst_18 = arith.constant 2.000000e-01 : f32
    %25 = vector.broadcast %cst_18 : f32 to vector<16x256xf32>
    %26 = arith.mulf %25, %22 : vector<16x256xf32>
    %27 = arith.select %24, %22, %26 : vector<16x256xi1>, vector<16x256xf32>
    %c0_19 = arith.constant 0 : index
    %c0_20 = arith.constant 0 : index
    %28 = vector.load %arg8[%c0_19, %c0_20] : memref<1x256xf32, #tpu.memory_space<vmem>>, vector<1x256xf32>
    %29 = vector.broadcast %28 : vector<1x256xf32> to vector<16x256xf32>
    %30 = arith.mulf %27, %29 : vector<16x256xf32>
    %cst_21 = arith.constant dense<0.000000e+00> : vector<16xf32>
    %31 = vector.multi_reduction <add>, %30, %cst_21 [1] : vector<16x256xf32> to vector<16xf32>
    %32 = vector.shape_cast %31 : vector<16xf32> to vector<16x1xf32>
    %c0_22 = arith.constant 0 : index
    %c0_23 = arith.constant 0 : index
    %33 = memref.load %arg9[%c0_22, %c0_23] : memref<1x1xf32, #tpu.memory_space<smem>>
    %34 = vector.broadcast %33 : f32 to vector<16x1xf32>
    %35 = arith.addf %32, %34 : vector<16x1xf32>
    %36 = arith.negf %35 : vector<16x1xf32>
    %37 = math.exp %36 : vector<16x1xf32>
    %cst_24 = arith.constant 1.000000e+00 : f32
    %38 = vector.broadcast %cst_24 : f32 to vector<16x1xf32>
    %39 = arith.addf %38, %37 : vector<16x1xf32>
    %40 = arith.divf %38, %39 : vector<16x1xf32>
    %c0_25 = arith.constant 0 : index
    %c0_26 = arith.constant 0 : index
    %41 = vector.load %arg10[%c0_25, %c0_26] : memref<16x1xf32, #tpu.memory_space<vmem>>, vector<16x1xf32>
    tpu.vector_store %arg10[%c0_25, %c0_26], %40 {strides = array<i32>} : memref<16x1xf32, #tpu.memory_space<vmem>>, vector<16x1xf32>,
    return
  }
  func.func @transform_0(%arg0: i32) -> (i32, i32) {
    %c0_i32 = arith.constant 0 : i32
    %c0_i32_0 = arith.constant 0 : i32
    return %arg0, %c0_i32 : i32, i32
  }
  func.func @transform_1(%arg0: i32) -> (i32, i32) {
    %c0_i32 = arith.constant 0 : i32
    %c0_i32_0 = arith.constant 0 : i32
    return %arg0, %c0_i32 : i32, i32
  }
  func.func @transform_2(%arg0: i32) -> (i32, i32) {
    %c0_i32 = arith.constant 0 : i32
    %c0_i32_0 = arith.constant 0 : i32
    %c0_i32_1 = arith.constant 0 : i32
    return %c0_i32, %c0_i32_0 : i32, i32
  }
  func.func @transform_3(%arg0: i32) -> (i32, i32) {
    %c0_i32 = arith.constant 0 : i32
    %c0_i32_0 = arith.constant 0 : i32
    %c0_i32_1 = arith.constant 0 : i32
    return %c0_i32, %c0_i32_0 : i32, i32
  }
  func.func @transform_4(%arg0: i32) -> (i32, i32) {
    %c0_i32 = arith.constant 0 : i32
    %c0_i32_0 = arith.constant 0 : i32
    %c0_i32_1 = arith.constant 0 : i32
    return %c0_i32, %c0_i32_0 : i32, i32
  }
  func.func @transform_5(%arg0: i32) -> (i32, i32) {
    %c0_i32 = arith.constant 0 : i32
    %c0_i32_0 = arith.constant 0 : i32
    %c0_i32_1 = arith.constant 0 : i32
    return %c0_i32, %c0_i32_0 : i32, i32
  }
  func.func @transform_6(%arg0: i32) -> (i32, i32) {
    %c0_i32 = arith.constant 0 : i32
    %c0_i32_0 = arith.constant 0 : i32
    %c0_i32_1 = arith.constant 0 : i32
    return %c0_i32, %c0_i32_0 : i32, i32
  }
  func.func @transform_7(%arg0: i32) -> (i32, i32) {
    %c0_i32 = arith.constant 0 : i32
    %c0_i32_0 = arith.constant 0 : i32
    %c0_i32_1 = arith.constant 0 : i32
    return %c0_i32, %c0_i32_0 : i32, i32
  }
  func.func @transform_8(%arg0: i32) -> (i32, i32) {
    %c0_i32 = arith.constant 0 : i32
    %c0_i32_0 = arith.constant 0 : i32
    %c0_i32_1 = arith.constant 0 : i32
    return %c0_i32, %c0_i32_0 : i32, i32
  }
  func.func @transform_9(%arg0: i32) -> (i32, i32) {
    %c0_i32 = arith.constant 0 : i32
    %c0_i32_0 = arith.constant 0 : i32
    return %arg0, %c0_i32 : i32, i32
  }
}

</mosaic_0001>

<llo_original>
// kernel: discriminator_forward.1
$region0: #{discriminator_forward.1}
  #allocation0 [shape = 'u32[]', space=smem, size = 0x4, offset = 0x4, fixed_abs, tag = 'smem constant byte address 0x4 - core index']
  #allocation1 [shape = 'u32[144,128]{1,0:T(1,128)}', space=vmem, size = 0x12000, scoped, tag = 'internal scratch']
  #allocation2 [shape = 'f32[1,1]{1,0:T(1,128)S(6)}', space=smem, size = 0x200, scoped, tag = 'scoped memory for discriminator_forward.1']
  %s0 = inlined_call_operand.vmem [shape: f32[16,784], index: 0, kind: input, shape index: {}]
  %s1 = inlined_call_operand.vmem [shape: f32[16,10], index: 1, kind: input, shape index: {}]
  %s2 = inlined_call_operand.hbm [shape: bf16[784,512], index: 2, kind: input, shape index: {}]
  %s3 = inlined_call_operand.vmem [shape: bf16[10,512], index: 3, kind: input, shape index: {}]
  %s4 = inlined_call_operand.vmem [shape: f32[1,512], index: 4, kind: input, shape index: {}]
  %s5 = inlined_call_operand.vmem [shape: bf16[512,256], index: 5, kind: input, shape index: {}]
  %s6 = inlined_call_operand.vmem [shape: f32[1,256], index: 6, kind: input, shape index: {}]
  %s7 = inlined_call_operand.vmem [shape: f32[1,256], index: 7, kind: input, shape index: {}]
  %s8 = inlined_call_operand.<no memory space> [shape: f32[1,1], index: 8, kind: input, shape index: {}]
  %s9 = inlined_call_operand.vmem [shape: f32[16,1], index: 9, kind: output, shape index: {}]
  %s10 = sld [smem:[#allocation0]]
  $region50: #{discriminator_forward.1} parent=0
    _
  %s12 = ssub.s32 1, %s10
  %s13 = scalar_select 0, %s12, %s10
  %14 = sst [smem:[#allocation2]] %s8
  $region1: #{discriminator_forward.1} parent=0
    #allocation3 [shape = 'u8[802816]{0}', space=vmem, size = 0xc4000, scoped, tag = 'input window, operand 2, single buffered']
    #allocation4 [shape = 's32[1]{0}', space=sflag, size = 0x4, scoped, tag = 'scoped memory for discriminator_forward.1']
    %15 = vsyncpa [#allocation4], 0
    // Predicated region
    $region2: #{discriminator_forward.1} parent=1 // pred_check
      _
    $region3: #{discriminator_forward.1} parent=1 // pred_check_branch
      %17 = sbr.rel (0) target = $region5
    $region4: #{discriminator_forward.1} parent=1 // pred_region
      _
    $region5: #{discriminator_forward.1} parent=1 // pred_fallthru
      _
    // Predicated region
    $region6: #{discriminator_forward.1} parent=1 // pred_check
      _
    $region7: #{discriminator_forward.1} parent=1 // pred_check_branch
      %19 = sbr.rel (0) target = $region9
    $region8: #{discriminator_forward.1} parent=1 // pred_region
      _
    $region9: #{discriminator_forward.1} parent=1 // pred_fallthru
      _
    // Predicated region
    $region10: #{discriminator_forward.1} parent=1 // pred_check
      _
    $region11: #{discriminator_forward.1} parent=1 // pred_check_branch
      %21 = sbr.rel (0) target = $region13
    $region12: #{discriminator_forward.1} parent=1 // pred_region
      %s23 = ssub.s32 25088, 25088
      %24 = vsyncadd [#allocation4], %s23
      %s25 = sshll.u32 [#allocation3], 4
      %s26 = int_to_ptr.vmem [resolvable:$true] %s25
      %31 = dma.hbm_to_vmem [thread:$0]  %s2, 25088, %s26, [#allocation4], 256, 256, 16
    $region13: #{discriminator_forward.1} parent=1 // pred_fallthru
      _
    // Predicated region
    $region14: #{discriminator_forward.1} parent=1 // pred_check
      _
    $region15: #{discriminator_forward.1} parent=1 // pred_check_branch
      %33 = sbr.rel (0) target = $region17
    $region16: #{discriminator_forward.1} parent=1 // pred_region
      _
    $region17: #{discriminator_forward.1} parent=1 // pred_fallthru
      _
    // Predicated region
    $region18: #{discriminator_forward.1} parent=1 // pred_check
      _
    $region19: #{discriminator_forward.1} parent=1 // pred_check_branch
      %35 = sbr.rel (0) target = $region21
    $region20: #{discriminator_forward.1} parent=1 // pred_region
      _
    $region21: #{discriminator_forward.1} parent=1 // pred_fallthru
      _
    // Predicated region
    $region22: #{discriminator_forward.1} parent=1 // pred_check
      _
    $region23: #{discriminator_forward.1} parent=1 // pred_check_branch
      %37 = sbr.rel (0) target = $region25
    $region24: #{discriminator_forward.1} parent=1 // pred_region
      _
    $region25: #{discriminator_forward.1} parent=1 // pred_fallthru
      _
    // Predicated region
    $region26: #{discriminator_forward.1} parent=1 // pred_check
      _
    $region27: #{discriminator_forward.1} parent=1 // pred_check_branch
      %39 = sbr.rel (0) target = $region29
    $region28: #{discriminator_forward.1} parent=1 // pred_region
      _
    $region29: #{discriminator_forward.1} parent=1 // pred_fallthru
      _
    // Predicated region
    $region30: #{discriminator_forward.1} parent=1 // pred_check
      _
    $region31: #{discriminator_forward.1} parent=1 // pred_check_branch
      %41 = sbr.rel (0) target = $region33
    $region32: #{discriminator_forward.1} parent=1 // pred_region
      _
    $region33: #{discriminator_forward.1} parent=1 // pred_fallthru
      _
    // Predicated region
    $region34: #{discriminator_forward.1} parent=1 // pred_check
      _
    $region35: #{discriminator_forward.1} parent=1 // pred_check_branch
      %43 = sbr.rel (0) target = $region37
    $region36: #{discriminator_forward.1} parent=1 // pred_region
      _
    $region37: #{discriminator_forward.1} parent=1 // pred_fallthru
      _
    // Predicated region
    $region38: #{discriminator_forward.1} parent=1 // pred_check
      _
    $region39: #{discriminator_forward.1} parent=1 // pred_check_branch
      %45 = sbr.rel (0) target = $region41
    $region40: #{discriminator_forward.1} parent=1 // pred_region
      %46 = dma.done [#allocation4], 25088
    $region41: #{discriminator_forward.1} parent=1 // pred_fallthru
      _
    %v48 = vld [vmem:[%s0] sm:$0xff]
    %v49 = vld [vmem:[%s0 + $0x8] sm:$0xff]
    %v50 = vld [vmem:[%s0 + $0x10] sm:$0xff]
    %v51 = vld [vmem:[%s0 + $0x18] sm:$0xff]
    %v52 = vld [vmem:[%s0 + $0x20] sm:$0xff]
    %v53 = vld [vmem:[%s0 + $0x28] sm:$0xff]
    %v54 = vld [vmem:[%s0 + $0x30] sm:$0xff]
    %v55 = vld [vmem:[%s0 + $0x38] sm:$0xff]
    %v56 = vld [vmem:[%s0 + $0x40] sm:$0xff]
    %v57 = vld [vmem:[%s0 + $0x48] sm:$0xff]
    %v58 = vld [vmem:[%s0 + $0x50] sm:$0xff]
    %v59 = vld [vmem:[%s0 + $0x58] sm:$0xff]
    %v60 = vld [vmem:[%s0 + $0x60] sm:$0xff]
    %v61 = vld [vmem:[%s0 + $0x68] sm:$0xff]
    %v62 = vpack.c.bf16 %v55, %v48
    %v63 = vpack.c.bf16 %v56, %v49
    %v64 = vpack.c.bf16 %v57, %v50
    %v65 = vpack.c.bf16 %v58, %v51
    %v66 = vpack.c.bf16 %v59, %v52
    %v67 = vpack.c.bf16 %v60, %v53
    %v68 = vpack.c.bf16 %v61, %v54
    %v69 = vld [vmem:[%s1] sm:$0xff]
    %v70 = vld [vmem:[%s1 + $0x8] sm:$0xff]
    %v71 = vpack.c.bf16 %v70, %v69
    %v72 = vld [vmem:[#allocation3] sm:$0xff]
    %v73 = vld [vmem:[#allocation3 + $0x8] sm:$0xff]
    %v74 = vld [vmem:[#allocation3 + $0x10] sm:$0xff]
    %v75 = vld [vmem:[#allocation3 + $0x18] sm:$0xff]
    %v76 = vld [vmem:[#allocation3 + $0x20] sm:$0xff]
    %v77 = vld [vmem:[#allocation3 + $0x28] sm:$0xff]
    %v78 = vld [vmem:[#allocation3 + $0x30] sm:$0xff]
    %v79 = vld [vmem:[#allocation3 + $0x38] sm:$0xff]
    %v80 = vld [vmem:[#allocation3 + $0x40] sm:$0xff]
    %v81 = vld [vmem:[#allocation3 + $0x48] sm:$0xff]
    %v82 = vld [vmem:[#allocation3 + $0x50] sm:$0xff]
    %v83 = vld [vmem:[#allocation3 + $0x58] sm:$0xff]
    %v84 = vld [vmem:[#allocation3 + $0x60] sm:$0xff]
    %v85 = vld [vmem:[#allocation3 + $0x68] sm:$0xff]
    %v86 = vld [vmem:[#allocation3 + $0x70] sm:$0xff]
    %v87 = vld [vmem:[#allocation3 + $0x78] sm:$0xff]
    %v88 = vld [vmem:[#allocation3 + $0x80] sm:$0xff]
    %v89 = vld [vmem:[#allocation3 + $0x88] sm:$0xff]
    %v90 = vld [vmem:[#allocation3 + $0x90] sm:$0xff]
    %v91 = vld [vmem:[#allocation3 + $0x98] sm:$0xff]
    %v92 = vld [vmem:[#allocation3 + $0xa0] sm:$0xff]
    %v93 = vld [vmem:[#allocation3 + $0xa8] sm:$0xff]
    %v94 = vld [vmem:[#allocation3 + $0xb0] sm:$0xff]
    %v95 = vld [vmem:[#allocation3 + $0xb8] sm:$0xff]
    %v96 = vld [vmem:[#allocation3 + $0xc0] sm:$0xff]
    %v97 = vld [vmem:[#allocation3 + $0xc8] sm:$0xff]
    %v98 = vld [vmem:[#allocation3 + $0xd0] sm:$0xff]
    %v99 = vld [vmem:[#allocation3 + $0xd8] sm:$0xff]
    %v100 = vld [vmem:[#allocation3 + $0xe0] sm:$0xff]
    %v101 = vld [vmem:[#allocation3 + $0xe8] sm:$0xff]
    %v102 = vld [vmem:[#allocation3 + $0xf0] sm:$0xff]
    %v103 = vld [vmem:[#allocation3 + $0xf8] sm:$0xff]
    %v104 = vld [vmem:[#allocation3 + $0x100] sm:$0xff]
    %v105 = vld [vmem:[#allocation3 + $0x108] sm:$0xff]
    %v106 = vld [vmem:[#allocation3 + $0x110] sm:$0xff]
    %v107 = vld [vmem:[#allocation3 + $0x118] sm:$0xff]
    %v108 = vld [vmem:[#allocation3 + $0x120] sm:$0xff]
    %v109 = vld [vmem:[#allocation3 + $0x128] sm:$0xff]
    %v110 = vld [vmem:[#allocation3 + $0x130] sm:$0xff]
    %v111 = vld [vmem:[#allocation3 + $0x138] sm:$0xff]
    %v112 = vld [vmem:[#allocation3 + $0x140] sm:$0xff]
    %v113 = vld [vmem:[#allocation3 + $0x148] sm:$0xff]
    %v114 = vld [vmem:[#allocation3 + $0x150] sm:$0xff]
    %v115 = vld [vmem:[#allocation3 + $0x158] sm:$0xff]
    %v116 = vld [vmem:[#allocation3 + $0x160] sm:$0xff]
    %v117 = vld [vmem:[#allocation3 + $0x168] sm:$0xff]
    %v118 = vld [vmem:[#allocation3 + $0x170] sm:$0xff]
    %v119 = vld [vmem:[#allocation3 + $0x178] sm:$0xff]
    %v120 = vld [vmem:[#allocation3 + $0x180] sm:$0xff]
    %v121 = vld [vmem:[#allocation3 + $0x188] sm:$0xff]
    %v122 = vld [vmem:[#allocation3 + $0x190] sm:$0xff]
    %v123 = vld [vmem:[#allocation3 + $0x198] sm:$0xff]
    %v124 = vld [vmem:[#allocation3 + $0x1a0] sm:$0xff]
    %v125 = vld [vmem:[#allocation3 + $0x1a8] sm:$0xff]
    %v126 = vld [vmem:[#allocation3 + $0x1b0] sm:$0xff]
    %v127 = vld [vmem:[#allocation3 + $0x1b8] sm:$0xff]
    %v128 = vld [vmem:[#allocation3 + $0x1c0] sm:$0xff]
    %v129 = vld [vmem:[#allocation3 + $0x1c8] sm:$0xff]
    %v130 = vld [vmem:[#allocation3 + $0x1d0] sm:$0xff]
    %v131 = vld [vmem:[#allocation3 + $0x1d8] sm:$0xff]
    %v132 = vld [vmem:[#allocation3 + $0x1e0] sm:$0xff]
    %v133 = vld [vmem:[#allocation3 + $0x1e8] sm:$0xff]
    %v134 = vld [vmem:[#allocation3 + $0x1f0] sm:$0xff]
    %v135 = vld [vmem:[#allocation3 + $0x1f8] sm:$0xff]
    %v136 = vld [vmem:[#allocation3 + $0x200] sm:$0xff]
    %v137 = vld [vmem:[#allocation3 + $0x208] sm:$0xff]
    %v138 = vld [vmem:[#allocation3 + $0x210] sm:$0xff]
    %v139 = vld [vmem:[#allocation3 + $0x218] sm:$0xff]
    %v140 = vld [vmem:[#allocation3 + $0x220] sm:$0xff]
    %v141 = vld [vmem:[#allocation3 + $0x228] sm:$0xff]
    %v142 = vld [vmem:[#allocation3 + $0x230] sm:$0xff]
    %v143 = vld [vmem:[#allocation3 + $0x238] sm:$0xff]
    %v144 = vld [vmem:[#allocation3 + $0x240] sm:$0xff]
    %v145 = vld [vmem:[#allocation3 + $0x248] sm:$0xff]
    %v146 = vld [vmem:[#allocation3 + $0x250] sm:$0xff]
    %v147 = vld [vmem:[#allocation3 + $0x258] sm:$0xff]
    %v148 = vld [vmem:[#allocation3 + $0x260] sm:$0xff]
    %v149 = vld [vmem:[#allocation3 + $0x268] sm:$0xff]
    %v150 = vld [vmem:[#allocation3 + $0x270] sm:$0xff]
    %v151 = vld [vmem:[#allocation3 + $0x278] sm:$0xff]
    %v152 = vld [vmem:[#allocation3 + $0x280] sm:$0xff]
    %v153 = vld [vmem:[#allocation3 + $0x288] sm:$0xff]
    %v154 = vld [vmem:[#allocation3 + $0x290] sm:$0xff]
    %v155 = vld [vmem:[#allocation3 + $0x298] sm:$0xff]
    %v156 = vld [vmem:[#allocation3 + $0x2a0] sm:$0xff]
    %v157 = vld [vmem:[#allocation3 + $0x2a8] sm:$0xff]
    %v158 = vld [vmem:[#allocation3 + $0x2b0] sm:$0xff]
    %v159 = vld [vmem:[#allocation3 + $0x2b8] sm:$0xff]
    %v160 = vld [vmem:[#allocation3 + $0x2c0] sm:$0xff]
    %v161 = vld [vmem:[#allocation3 + $0x2c8] sm:$0xff]
    %v162 = vld [vmem:[#allocation3 + $0x2d0] sm:$0xff]
    %v163 = vld [vmem:[#allocation3 + $0x2d8] sm:$0xff]
    %v164 = vld [vmem:[#allocation3 + $0x2e0] sm:$0xff]
    %v165 = vld [vmem:[#allocation3 + $0x2e8] sm:$0xff]
    %v166 = vld [vmem:[#allocation3 + $0x2f0] sm:$0xff]
    %v167 = vld [vmem:[#allocation3 + $0x2f8] sm:$0xff]
    %v168 = vld [vmem:[#allocation3 + $0x300] sm:$0xff]
    %v169 = vld [vmem:[#allocation3 + $0x308] sm:$0xff]
    %v170 = vld [vmem:[#allocation3 + $0x310] sm:$0xff]
    %v171 = vld [vmem:[#allocation3 + $0x318] sm:$0xff]
    %v172 = vld [vmem:[#allocation3 + $0x320] sm:$0xff]
    %v173 = vld [vmem:[#allocation3 + $0x328] sm:$0xff]
    %v174 = vld [vmem:[#allocation3 + $0x330] sm:$0xff]
    %v175 = vld [vmem:[#allocation3 + $0x338] sm:$0xff]
    %v176 = vld [vmem:[#allocation3 + $0x340] sm:$0xff]
    %v177 = vld [vmem:[#allocation3 + $0x348] sm:$0xff]
    %v178 = vld [vmem:[#allocation3 + $0x350] sm:$0xff]
    %v179 = vld [vmem:[#allocation3 + $0x358] sm:$0xff]
    %v180 = vld [vmem:[#allocation3 + $0x360] sm:$0xff]
    %v181 = vld [vmem:[#allocation3 + $0x368] sm:$0xff]
    %v182 = vld [vmem:[#allocation3 + $0x370] sm:$0xff]
    %v183 = vld [vmem:[#allocation3 + $0x378] sm:$0xff]
    %v184 = vld [vmem:[#allocation3 + $0x380] sm:$0xff]
    %v185 = vld [vmem:[#allocation3 + $0x388] sm:$0xff]
    %v186 = vld [vmem:[#allocation3 + $0x390] sm:$0xff]
    %v187 = vld [vmem:[#allocation3 + $0x398] sm:$0xff]
    %v188 = vld [vmem:[#allocation3 + $0x3a0] sm:$0xff]
    %v189 = vld [vmem:[#allocation3 + $0x3a8] sm:$0xff]
    %v190 = vld [vmem:[#allocation3 + $0x3b0] sm:$0xff]
    %v191 = vld [vmem:[#allocation3 + $0x3b8] sm:$0xff]
    %v192 = vld [vmem:[#allocation3 + $0x3c0] sm:$0xff]
    %v193 = vld [vmem:[#allocation3 + $0x3c8] sm:$0xff]
    %v194 = vld [vmem:[#allocation3 + $0x3d0] sm:$0xff]
    %v195 = vld [vmem:[#allocation3 + $0x3d8] sm:$0xff]
    %v196 = vld [vmem:[#allocation3 + $0x3e0] sm:$0xff]
    %v197 = vld [vmem:[#allocation3 + $0x3e8] sm:$0xff]
    %v198 = vld [vmem:[#allocation3 + $0x3f0] sm:$0xff]
    %v199 = vld [vmem:[#allocation3 + $0x3f8] sm:$0xff]
    %v200 = vld [vmem:[#allocation3 + $0x400] sm:$0xff]
    %v201 = vld [vmem:[#allocation3 + $0x408] sm:$0xff]
    %v202 = vld [vmem:[#allocation3 + $0x410] sm:$0xff]
    %v203 = vld [vmem:[#allocation3 + $0x418] sm:$0xff]
    %v204 = vld [vmem:[#allocation3 + $0x420] sm:$0xff]
    %v205 = vld [vmem:[#allocation3 + $0x428] sm:$0xff]
    %v206 = vld [vmem:[#allocation3 + $0x430] sm:$0xff]
    %v207 = vld [vmem:[#allocation3 + $0x438] sm:$0xff]
    %v208 = vld [vmem:[#allocation3 + $0x440] sm:$0xff]
    %v209 = vld [vmem:[#allocation3 + $0x448] sm:$0xff]
    %v210 = vld [vmem:[#allocation3 + $0x450] sm:$0xff]
    %v211 = vld [vmem:[#allocation3 + $0x458] sm:$0xff]
    %v212 = vld [vmem:[#allocation3 + $0x460] sm:$0xff]
    %v213 = vld [vmem:[#allocation3 + $0x468] sm:$0xff]
    %v214 = vld [vmem:[#allocation3 + $0x470] sm:$0xff]
    %v215 = vld [vmem:[#allocation3 + $0x478] sm:$0xff]
    %v216 = vld [vmem:[#allocation3 + $0x480] sm:$0xff]
    %v217 = vld [vmem:[#allocation3 + $0x488] sm:$0xff]
    %v218 = vld [vmem:[#allocation3 + $0x490] sm:$0xff]
    %v219 = vld [vmem:[#allocation3 + $0x498] sm:$0xff]
    %v220 = vld [vmem:[#allocation3 + $0x4a0] sm:$0xff]
    %v221 = vld [vmem:[#allocation3 + $0x4a8] sm:$0xff]
    %v222 = vld [vmem:[#allocation3 + $0x4b0] sm:$0xff]
    %v223 = vld [vmem:[#allocation3 + $0x4b8] sm:$0xff]
    %v224 = vld [vmem:[#allocation3 + $0x4c0] sm:$0xff]
    %v225 = vld [vmem:[#allocation3 + $0x4c8] sm:$0xff]
    %v226 = vld [vmem:[#allocation3 + $0x4d0] sm:$0xff]
    %v227 = vld [vmem:[#allocation3 + $0x4d8] sm:$0xff]
    %v228 = vld [vmem:[#allocation3 + $0x4e0] sm:$0xff]
    %v229 = vld [vmem:[#allocation3 + $0x4e8] sm:$0xff]
    %v230 = vld [vmem:[#allocation3 + $0x4f0] sm:$0xff]
    %v231 = vld [vmem:[#allocation3 + $0x4f8] sm:$0xff]
    %v232 = vld [vmem:[#allocation3 + $0x500] sm:$0xff]
    %v233 = vld [vmem:[#allocation3 + $0x508] sm:$0xff]
    %v234 = vld [vmem:[#allocation3 + $0x510] sm:$0xff]
    %v235 = vld [vmem:[#allocation3 + $0x518] sm:$0xff]
    %v236 = vld [vmem:[#allocation3 + $0x520] sm:$0xff]
    %v237 = vld [vmem:[#allocation3 + $0x528] sm:$0xff]
    %v238 = vld [vmem:[#allocation3 + $0x530] sm:$0xff]
    %v239 = vld [vmem:[#allocation3 + $0x538] sm:$0xff]
    %v240 = vld [vmem:[#allocation3 + $0x540] sm:$0xff]
    %v241 = vld [vmem:[#allocation3 + $0x548] sm:$0xff]
    %v242 = vld [vmem:[#allocation3 + $0x550] sm:$0xff]
    %v243 = vld [vmem:[#allocation3 + $0x558] sm:$0xff]
    %v244 = vld [vmem:[#allocation3 + $0x560] sm:$0xff]
    %v245 = vld [vmem:[#allocation3 + $0x568] sm:$0xff]
    %v246 = vld [vmem:[#allocation3 + $0x570] sm:$0xff]
    %v247 = vld [vmem:[#allocation3 + $0x578] sm:$0xff]
    %v248 = vld [vmem:[#allocation3 + $0x580] sm:$0xff]
    %v249 = vld [vmem:[#allocation3 + $0x588] sm:$0xff]
    %v250 = vld [vmem:[#allocation3 + $0x590] sm:$0xff]
    %v251 = vld [vmem:[#allocation3 + $0x598] sm:$0xff]
    %v252 = vld [vmem:[#allocation3 + $0x5a0] sm:$0xff]
    %v253 = vld [vmem:[#allocation3 + $0x5a8] sm:$0xff]
    %v254 = vld [vmem:[#allocation3 + $0x5b0] sm:$0xff]
    %v255 = vld [vmem:[#allocation3 + $0x5b8] sm:$0xff]
    %v256 = vld [vmem:[#allocation3 + $0x5c0] sm:$0xff]
    %v257 = vld [vmem:[#allocation3 + $0x5c8] sm:$0xff]
    %v258 = vld [vmem:[#allocation3 + $0x5d0] sm:$0xff]
    %v259 = vld [vmem:[#allocation3 + $0x5d8] sm:$0xff]
    %v260 = vld [vmem:[#allocation3 + $0x5e0] sm:$0xff]
    %v261 = vld [vmem:[#allocation3 + $0x5e8] sm:$0xff]
    %v262 = vld [vmem:[#allocation3 + $0x5f0] sm:$0xff]
    %v263 = vld [vmem:[#allocation3 + $0x5f8] sm:$0xff]
    %v264 = vld [vmem:[#allocation3 + $0x600] sm:$0xff]
    %v265 = vld [vmem:[#allocation3 + $0x608] sm:$0xff]
    %v266 = vld [vmem:[#allocation3 + $0x610] sm:$0xff]
    %v267 = vld [vmem:[#allocation3 + $0x618] sm:$0xff]
    %v268 = vld [vmem:[%s3] sm:$0xff]
    %v269 = vld [vmem:[%s3 + $0x8] sm:$0xff]
    %v270 = vld [vmem:[%s3 + $0x10] sm:$0x11]
    %v271 = vld [vmem:[%s3 + $0x18] sm:$0x11]
    %v276 = vunpack.c.l.b16 %v268
    %v277 = vunpack.c.h.b16 %v268
    %v278 = vunpack.c.l.b16 %v269
    %v279 = vunpack.c.h.b16 %v269
    %v280 = vunpack.c.l.b16 %v270
    %v281 = vunpack.c.h.b16 %v270
    %v282 = vunpack.c.l.b16 %v271
    %v283 = vunpack.c.h.b16 %v271
    %v284 = vpack.c.b16 %v280, %v276
    %v285 = vpack.c.b16 %v281, %v277
    %v286 = vpack.c.b16 %v282, %v278
    %v287 = vpack.c.b16 %v283, %v279
    %vm288 = vcmask 80896
    %v290 = vsel %vm288, %v71, 0
    %vm292 = vcmask 1044480
    %v294 = vsel %vm292, %v284, 0
    %v297 = vsel %vm292, %v285, 0
    %v300 = vsel %vm292, %v286, 0
    %v303 = vsel %vm292, %v287, 0
    %305 = vmatprep.subr.bf16.mxu0 0
    %306 = vmatpush1.bf16.msra.mxu0 0
    %307 = vmatprep.subr.bf16.mxu0 0
    %308 = vmatpush1.bf16.msra.mxu0 0
    %309 = vmatprep.subr.bf16.mxu0 0
    %310 = vmatpush1.bf16.msra.mxu0 0
    %311 = vmatprep.subr.bf16.mxu0 0
    %312 = vmatpush1.bf16.msra.mxu0 0
    %313 = vmatprep.subr.bf16.mxu0 0
    %314 = vmatpush1.bf16.msra.mxu0 0
    %315 = vmatprep.subr.bf16.mxu0 0
    %316 = vmatpush1.bf16.msra.mxu0 0
    %317 = vmatprep.subr.bf16.mxu0 0
    %318 = vmatpush1.bf16.msra.mxu0 0
    %319 = vmatprep.subr.bf16.mxu0 %v297
    %320 = vmatpush1.bf16.msra.mxu0 %v294
    %321 = vmatprep.subr.bf16.mxu0 0
    %322 = vmatpush2.bf16.msra.mxu0 0
    %323 = vmatprep.subr.bf16.mxu0 0
    %324 = vmatpush2.bf16.msra.mxu0 0
    %325 = vmatprep.subr.bf16.mxu0 0
    %326 = vmatpush2.bf16.msra.mxu0 0
    %327 = vmatprep.subr.bf16.mxu0 0
    %328 = vmatpush2.bf16.msra.mxu0 0
    %329 = vmatprep.subr.bf16.mxu0 0
    %330 = vmatpush2.bf16.msra.mxu0 0
    %331 = vmatprep.subr.bf16.mxu0 0
    %332 = vmatpush2.bf16.msra.mxu0 0
    %333 = vmatprep.subr.bf16.mxu0 0
    %334 = vmatpush2.bf16.msra.mxu0 0
    %335 = vmatprep.subr.bf16.mxu0 0
    %336 = vmatpush2.bf16.msra.mxu0 0
    %337 = vmatprep.mubr.bf16.mxu0 0
    %338 = vmatmul.mubr.bf16.gmra.mxu0 %v290
    %v339 = vpop.f32.mrf.mxu0
    %v340 = vadd.f32 0.0, %v339
    %v341 = vpop.f32.mrf.mxu0
    %v342 = vadd.f32 0.0, %v341
    %v343 = vpop.f32.mrf.mxu0
    %v344 = vadd.f32 0.0, %v343
    %v345 = vpop.f32.mrf.mxu0
    %v346 = vadd.f32 0.0, %v345
    %347 = vdwg.mxu0
    %348 = vmatprep.subr.bf16.mxu0 0
    %349 = vmatpush1.bf16.msra.mxu0 0
    %350 = vmatprep.subr.bf16.mxu0 0
    %351 = vmatpush1.bf16.msra.mxu0 0
    %352 = vmatprep.subr.bf16.mxu0 0
    %353 = vmatpush1.bf16.msra.mxu0 0
    %354 = vmatprep.subr.bf16.mxu0 0
    %355 = vmatpush1.bf16.msra.mxu0 0
    %356 = vmatprep.subr.bf16.mxu0 0
    %357 = vmatpush1.bf16.msra.mxu0 0
    %358 = vmatprep.subr.bf16.mxu0 0
    %359 = vmatpush1.bf16.msra.mxu0 0
    %360 = vmatprep.subr.bf16.mxu0 0
    %361 = vmatpush1.bf16.msra.mxu0 0
    %362 = vmatprep.subr.bf16.mxu0 %v303
    %363 = vmatpush1.bf16.msra.mxu0 %v300
    %364 = vmatprep.subr.bf16.mxu0 0
    %365 = vmatpush2.bf16.msra.mxu0 0
    %366 = vmatprep.subr.bf16.mxu0 0
    %367 = vmatpush2.bf16.msra.mxu0 0
    %368 = vmatprep.subr.bf16.mxu0 0
    %369 = vmatpush2.bf16.msra.mxu0 0
    %370 = vmatprep.subr.bf16.mxu0 0
    %371 = vmatpush2.bf16.msra.mxu0 0
    %372 = vmatprep.subr.bf16.mxu0 0
    %373 = vmatpush2.bf16.msra.mxu0 0
    %374 = vmatprep.subr.bf16.mxu0 0
    %375 = vmatpush2.bf16.msra.mxu0 0
    %376 = vmatprep.subr.bf16.mxu0 0
    %377 = vmatpush2.bf16.msra.mxu0 0
    %378 = vmatprep.subr.bf16.mxu0 0
    %379 = vmatpush2.bf16.msra.mxu0 0
    %380 = vmatprep.mubr.bf16.mxu0 0
    %381 = vmatmul.mubr.bf16.gmra.mxu0 %v290
    %v382 = vpop.f32.mrf.mxu0
    %v383 = vadd.f32 0.0, %v382
    %v384 = vpop.f32.mrf.mxu0
    %v385 = vadd.f32 0.0, %v384
    %v386 = vpop.f32.mrf.mxu0
    %v387 = vadd.f32 0.0, %v386
    %v388 = vpop.f32.mrf.mxu0
    %v389 = vadd.f32 0.0, %v388
    %390 = vdwg.mxu0
    %v587 = vunpack.c.l.b16 %v72
    %v588 = vunpack.c.h.b16 %v72
    %v589 = vunpack.c.l.b16 %v73
    %v590 = vunpack.c.h.b16 %v73
    %v591 = vunpack.c.l.b16 %v74
    %v592 = vunpack.c.h.b16 %v74
    %v593 = vunpack.c.l.b16 %v75
    %v594 = vunpack.c.h.b16 %v75
    %v595 = vunpack.c.l.b16 %v76
    %v596 = vunpack.c.h.b16 %v76
    %v597 = vunpack.c.l.b16 %v77
    %v598 = vunpack.c.h.b16 %v77
    %v599 = vunpack.c.l.b16 %v78
    %v600 = vunpack.c.h.b16 %v78
    %v601 = vunpack.c.l.b16 %v79
    %v602 = vunpack.c.h.b16 %v79
    %v603 = vunpack.c.l.b16 %v80
    %v604 = vunpack.c.h.b16 %v80
    %v605 = vunpack.c.l.b16 %v81
    %v606 = vunpack.c.h.b16 %v81
    %v607 = vunpack.c.l.b16 %v82
    %v608 = vunpack.c.h.b16 %v82
    %v609 = vunpack.c.l.b16 %v83
    %v610 = vunpack.c.h.b16 %v83
    %v611 = vunpack.c.l.b16 %v84
    %v612 = vunpack.c.h.b16 %v84
    %v613 = vunpack.c.l.b16 %v85
    %v614 = vunpack.c.h.b16 %v85
    %v615 = vunpack.c.l.b16 %v86
    %v616 = vunpack.c.h.b16 %v86
    %v617 = vunpack.c.l.b16 %v87
    %v618 = vunpack.c.h.b16 %v87
    %v619 = vunpack.c.l.b16 %v88
    %v620 = vunpack.c.h.b16 %v88
    %v621 = vunpack.c.l.b16 %v89
    %v622 = vunpack.c.h.b16 %v89
    %v623 = vunpack.c.l.b16 %v90
    %v624 = vunpack.c.h.b16 %v90
    %v625 = vunpack.c.l.b16 %v91
    %v626 = vunpack.c.h.b16 %v91
    %v627 = vunpack.c.l.b16 %v92
    %v628 = vunpack.c.h.b16 %v92
    %v629 = vunpack.c.l.b16 %v93
    %v630 = vunpack.c.h.b16 %v93
    %v631 = vunpack.c.l.b16 %v94
    %v632 = vunpack.c.h.b16 %v94
    %v633 = vunpack.c.l.b16 %v95
    %v634 = vunpack.c.h.b16 %v95
    %v635 = vunpack.c.l.b16 %v96
    %v636 = vunpack.c.h.b16 %v96
    %v637 = vunpack.c.l.b16 %v97
    %v638 = vunpack.c.h.b16 %v97
    %v639 = vunpack.c.l.b16 %v98
    %v640 = vunpack.c.h.b16 %v98
    %v641 = vunpack.c.l.b16 %v99
    %v642 = vunpack.c.h.b16 %v99
    %v643 = vunpack.c.l.b16 %v100
    %v644 = vunpack.c.h.b16 %v100
    %v645 = vunpack.c.l.b16 %v101
    %v646 = vunpack.c.h.b16 %v101
    %v647 = vunpack.c.l.b16 %v102
    %v648 = vunpack.c.h.b16 %v102
    %v649 = vunpack.c.l.b16 %v103
    %v650 = vunpack.c.h.b16 %v103
    %v651 = vunpack.c.l.b16 %v104
    %v652 = vunpack.c.h.b16 %v104
    %v653 = vunpack.c.l.b16 %v105
    %v654 = vunpack.c.h.b16 %v105
    %v655 = vunpack.c.l.b16 %v106
    %v656 = vunpack.c.h.b16 %v106
    %v657 = vunpack.c.l.b16 %v107
    %v658 = vunpack.c.h.b16 %v107
    %v659 = vunpack.c.l.b16 %v108
    %v660 = vunpack.c.h.b16 %v108
    %v661 = vunpack.c.l.b16 %v109
    %v662 = vunpack.c.h.b16 %v109
    %v663 = vunpack.c.l.b16 %v110
    %v664 = vunpack.c.h.b16 %v110
    %v665 = vunpack.c.l.b16 %v111
    %v666 = vunpack.c.h.b16 %v111
    %v667 = vunpack.c.l.b16 %v112
    %v668 = vunpack.c.h.b16 %v112
    %v669 = vunpack.c.l.b16 %v113
    %v670 = vunpack.c.h.b16 %v113
    %v671 = vunpack.c.l.b16 %v114
    %v672 = vunpack.c.h.b16 %v114
    %v673 = vunpack.c.l.b16 %v115
    %v674 = vunpack.c.h.b16 %v115
    %v675 = vunpack.c.l.b16 %v116
    %v676 = vunpack.c.h.b16 %v116
    %v677 = vunpack.c.l.b16 %v117
    %v678 = vunpack.c.h.b16 %v117
    %v679 = vunpack.c.l.b16 %v118
    %v680 = vunpack.c.h.b16 %v118
    %v681 = vunpack.c.l.b16 %v119
    %v682 = vunpack.c.h.b16 %v119
    %v683 = vunpack.c.l.b16 %v120
    %v684 = vunpack.c.h.b16 %v120
    %v685 = vunpack.c.l.b16 %v121
    %v686 = vunpack.c.h.b16 %v121
    %v687 = vunpack.c.l.b16 %v122
    %v688 = vunpack.c.h.b16 %v122
    %v689 = vunpack.c.l.b16 %v123
    %v690 = vunpack.c.h.b16 %v123
    %v691 = vunpack.c.l.b16 %v124
    %v692 = vunpack.c.h.b16 %v124
    %v693 = vunpack.c.l.b16 %v125
    %v694 = vunpack.c.h.b16 %v125
    %v695 = vunpack.c.l.b16 %v126
    %v696 = vunpack.c.h.b16 %v126
    %v697 = vunpack.c.l.b16 %v127
    %v698 = vunpack.c.h.b16 %v127
    %v699 = vunpack.c.l.b16 %v128
    %v700 = vunpack.c.h.b16 %v128
    %v701 = vunpack.c.l.b16 %v129
    %v702 = vunpack.c.h.b16 %v129
    %v703 = vunpack.c.l.b16 %v130
    %v704 = vunpack.c.h.b16 %v130
    %v705 = vunpack.c.l.b16 %v131
    %v706 = vunpack.c.h.b16 %v131
    %v707 = vunpack.c.l.b16 %v132
    %v708 = vunpack.c.h.b16 %v132
    %v709 = vunpack.c.l.b16 %v133
    %v710 = vunpack.c.h.b16 %v133
    %v711 = vunpack.c.l.b16 %v134
    %v712 = vunpack.c.h.b16 %v134
    %v713 = vunpack.c.l.b16 %v135
    %v714 = vunpack.c.h.b16 %v135
    %v715 = vunpack.c.l.b16 %v136
    %v716 = vunpack.c.h.b16 %v136
    %v717 = vunpack.c.l.b16 %v137
    %v718 = vunpack.c.h.b16 %v137
    %v719 = vunpack.c.l.b16 %v138
    %v720 = vunpack.c.h.b16 %v138
    %v721 = vunpack.c.l.b16 %v139
    %v722 = vunpack.c.h.b16 %v139
    %v723 = vunpack.c.l.b16 %v140
    %v724 = vunpack.c.h.b16 %v140
    %v725 = vunpack.c.l.b16 %v141
    %v726 = vunpack.c.h.b16 %v141
    %v727 = vunpack.c.l.b16 %v142
    %v728 = vunpack.c.h.b16 %v142
    %v729 = vunpack.c.l.b16 %v143
    %v730 = vunpack.c.h.b16 %v143
    %v731 = vunpack.c.l.b16 %v144
    %v732 = vunpack.c.h.b16 %v144
    %v733 = vunpack.c.l.b16 %v145
    %v734 = vunpack.c.h.b16 %v145
    %v735 = vunpack.c.l.b16 %v146
    %v736 = vunpack.c.h.b16 %v146
    %v737 = vunpack.c.l.b16 %v147
    %v738 = vunpack.c.h.b16 %v147
    %v739 = vunpack.c.l.b16 %v148
    %v740 = vunpack.c.h.b16 %v148
    %v741 = vunpack.c.l.b16 %v149
    %v742 = vunpack.c.h.b16 %v149
    %v743 = vunpack.c.l.b16 %v150
    %v744 = vunpack.c.h.b16 %v150
    %v745 = vunpack.c.l.b16 %v151
    %v746 = vunpack.c.h.b16 %v151
    %v747 = vunpack.c.l.b16 %v152
    %v748 = vunpack.c.h.b16 %v152
    %v749 = vunpack.c.l.b16 %v153
    %v750 = vunpack.c.h.b16 %v153
    %v751 = vunpack.c.l.b16 %v154
    %v752 = vunpack.c.h.b16 %v154
    %v753 = vunpack.c.l.b16 %v155
    %v754 = vunpack.c.h.b16 %v155
    %v755 = vunpack.c.l.b16 %v156
    %v756 = vunpack.c.h.b16 %v156
    %v757 = vunpack.c.l.b16 %v157
    %v758 = vunpack.c.h.b16 %v157
    %v759 = vunpack.c.l.b16 %v158
    %v760 = vunpack.c.h.b16 %v158
    %v761 = vunpack.c.l.b16 %v159
    %v762 = vunpack.c.h.b16 %v159
    %v763 = vunpack.c.l.b16 %v160
    %v764 = vunpack.c.h.b16 %v160
    %v765 = vunpack.c.l.b16 %v161
    %v766 = vunpack.c.h.b16 %v161
    %v767 = vunpack.c.l.b16 %v162
    %v768 = vunpack.c.h.b16 %v162
    %v769 = vunpack.c.l.b16 %v163
    %v770 = vunpack.c.h.b16 %v163
    %v771 = vunpack.c.l.b16 %v164
    %v772 = vunpack.c.h.b16 %v164
    %v773 = vunpack.c.l.b16 %v165
    %v774 = vunpack.c.h.b16 %v165
    %v775 = vunpack.c.l.b16 %v166
    %v776 = vunpack.c.h.b16 %v166
    %v777 = vunpack.c.l.b16 %v167
    %v778 = vunpack.c.h.b16 %v167
    %v779 = vunpack.c.l.b16 %v168
    %v780 = vunpack.c.h.b16 %v168
    %v781 = vunpack.c.l.b16 %v169
    %v782 = vunpack.c.h.b16 %v169
    %v783 = vunpack.c.l.b16 %v170
    %v784 = vunpack.c.h.b16 %v170
    %v785 = vunpack.c.l.b16 %v171
    %v786 = vunpack.c.h.b16 %v171
    %v787 = vunpack.c.l.b16 %v172
    %v788 = vunpack.c.h.b16 %v172
    %v789 = vunpack.c.l.b16 %v173
    %v790 = vunpack.c.h.b16 %v173
    %v791 = vunpack.c.l.b16 %v174
    %v792 = vunpack.c.h.b16 %v174
    %v793 = vunpack.c.l.b16 %v175
    %v794 = vunpack.c.h.b16 %v175
    %v795 = vunpack.c.l.b16 %v176
    %v796 = vunpack.c.h.b16 %v176
    %v797 = vunpack.c.l.b16 %v177
    %v798 = vunpack.c.h.b16 %v177
    %v799 = vunpack.c.l.b16 %v178
    %v800 = vunpack.c.h.b16 %v178
    %v801 = vunpack.c.l.b16 %v179
    %v802 = vunpack.c.h.b16 %v179
    %v803 = vunpack.c.l.b16 %v180
    %v804 = vunpack.c.h.b16 %v180
    %v805 = vunpack.c.l.b16 %v181
    %v806 = vunpack.c.h.b16 %v181
    %v807 = vunpack.c.l.b16 %v182
    %v808 = vunpack.c.h.b16 %v182
    %v809 = vunpack.c.l.b16 %v183
    %v810 = vunpack.c.h.b16 %v183
    %v811 = vunpack.c.l.b16 %v184
    %v812 = vunpack.c.h.b16 %v184
    %v813 = vunpack.c.l.b16 %v185
    %v814 = vunpack.c.h.b16 %v185
    %v815 = vunpack.c.l.b16 %v186
    %v816 = vunpack.c.h.b16 %v186
    %v817 = vunpack.c.l.b16 %v187
    %v818 = vunpack.c.h.b16 %v187
    %v819 = vunpack.c.l.b16 %v188
    %v820 = vunpack.c.h.b16 %v188
    %v821 = vunpack.c.l.b16 %v189
    %v822 = vunpack.c.h.b16 %v189
    %v823 = vunpack.c.l.b16 %v190
    %v824 = vunpack.c.h.b16 %v190
    %v825 = vunpack.c.l.b16 %v191
    %v826 = vunpack.c.h.b16 %v191
    %v827 = vunpack.c.l.b16 %v192
    %v828 = vunpack.c.h.b16 %v192
    %v829 = vunpack.c.l.b16 %v193
    %v830 = vunpack.c.h.b16 %v193
    %v831 = vunpack.c.l.b16 %v194
    %v832 = vunpack.c.h.b16 %v194
    %v833 = vunpack.c.l.b16 %v195
    %v834 = vunpack.c.h.b16 %v195
    %v835 = vunpack.c.l.b16 %v196
    %v836 = vunpack.c.h.b16 %v196
    %v837 = vunpack.c.l.b16 %v197
    %v838 = vunpack.c.h.b16 %v197
    %v839 = vunpack.c.l.b16 %v198
    %v840 = vunpack.c.h.b16 %v198
    %v841 = vunpack.c.l.b16 %v199
    %v842 = vunpack.c.h.b16 %v199
    %v843 = vunpack.c.l.b16 %v200
    %v844 = vunpack.c.h.b16 %v200
    %v845 = vunpack.c.l.b16 %v201
    %v846 = vunpack.c.h.b16 %v201
    %v847 = vunpack.c.l.b16 %v202
    %v848 = vunpack.c.h.b16 %v202
    %v849 = vunpack.c.l.b16 %v203
    %v850 = vunpack.c.h.b16 %v203
    %v851 = vunpack.c.l.b16 %v204
    %v852 = vunpack.c.h.b16 %v204
    %v853 = vunpack.c.l.b16 %v205
    %v854 = vunpack.c.h.b16 %v205
    %v855 = vunpack.c.l.b16 %v206
    %v856 = vunpack.c.h.b16 %v206
    %v857 = vunpack.c.l.b16 %v207
    %v858 = vunpack.c.h.b16 %v207
    %v859 = vunpack.c.l.b16 %v208
    %v860 = vunpack.c.h.b16 %v208
    %v861 = vunpack.c.l.b16 %v209
    %v862 = vunpack.c.h.b16 %v209
    %v863 = vunpack.c.l.b16 %v210
    %v864 = vunpack.c.h.b16 %v210
    %v865 = vunpack.c.l.b16 %v211
    %v866 = vunpack.c.h.b16 %v211
    %v867 = vunpack.c.l.b16 %v212
    %v868 = vunpack.c.h.b16 %v212
    %v869 = vunpack.c.l.b16 %v213
    %v870 = vunpack.c.h.b16 %v213
    %v871 = vunpack.c.l.b16 %v214
    %v872 = vunpack.c.h.b16 %v214
    %v873 = vunpack.c.l.b16 %v215
    %v874 = vunpack.c.h.b16 %v215
    %v875 = vunpack.c.l.b16 %v216
    %v876 = vunpack.c.h.b16 %v216
    %v877 = vunpack.c.l.b16 %v217
    %v878 = vunpack.c.h.b16 %v217
    %v879 = vunpack.c.l.b16 %v218
    %v880 = vunpack.c.h.b16 %v218
    %v881 = vunpack.c.l.b16 %v219
    %v882 = vunpack.c.h.b16 %v219
    %v883 = vunpack.c.l.b16 %v220
    %v884 = vunpack.c.h.b16 %v220
    %v885 = vunpack.c.l.b16 %v221
    %v886 = vunpack.c.h.b16 %v221
    %v887 = vunpack.c.l.b16 %v222
    %v888 = vunpack.c.h.b16 %v222
    %v889 = vunpack.c.l.b16 %v223
    %v890 = vunpack.c.h.b16 %v223
    %v891 = vunpack.c.l.b16 %v224
    %v892 = vunpack.c.h.b16 %v224
    %v893 = vunpack.c.l.b16 %v225
    %v894 = vunpack.c.h.b16 %v225
    %v895 = vunpack.c.l.b16 %v226
    %v896 = vunpack.c.h.b16 %v226
    %v897 = vunpack.c.l.b16 %v227
    %v898 = vunpack.c.h.b16 %v227
    %v899 = vunpack.c.l.b16 %v228
    %v900 = vunpack.c.h.b16 %v228
    %v901 = vunpack.c.l.b16 %v229
    %v902 = vunpack.c.h.b16 %v229
    %v903 = vunpack.c.l.b16 %v230
    %v904 = vunpack.c.h.b16 %v230
    %v905 = vunpack.c.l.b16 %v231
    %v906 = vunpack.c.h.b16 %v231
    %v907 = vunpack.c.l.b16 %v232
    %v908 = vunpack.c.h.b16 %v232
    %v909 = vunpack.c.l.b16 %v233
    %v910 = vunpack.c.h.b16 %v233
    %v911 = vunpack.c.l.b16 %v234
    %v912 = vunpack.c.h.b16 %v234
    %v913 = vunpack.c.l.b16 %v235
    %v914 = vunpack.c.h.b16 %v235
    %v915 = vunpack.c.l.b16 %v236
    %v916 = vunpack.c.h.b16 %v236
    %v917 = vunpack.c.l.b16 %v237
    %v918 = vunpack.c.h.b16 %v237
    %v919 = vunpack.c.l.b16 %v238
    %v920 = vunpack.c.h.b16 %v238
    %v921 = vunpack.c.l.b16 %v239
    %v922 = vunpack.c.h.b16 %v239
    %v923 = vunpack.c.l.b16 %v240
    %v924 = vunpack.c.h.b16 %v240
    %v925 = vunpack.c.l.b16 %v241
    %v926 = vunpack.c.h.b16 %v241
    %v927 = vunpack.c.l.b16 %v242
    %v928 = vunpack.c.h.b16 %v242
    %v929 = vunpack.c.l.b16 %v243
    %v930 = vunpack.c.h.b16 %v243
    %v931 = vunpack.c.l.b16 %v244
    %v932 = vunpack.c.h.b16 %v244
    %v933 = vunpack.c.l.b16 %v245
    %v934 = vunpack.c.h.b16 %v245
    %v935 = vunpack.c.l.b16 %v246
    %v936 = vunpack.c.h.b16 %v246
    %v937 = vunpack.c.l.b16 %v247
    %v938 = vunpack.c.h.b16 %v247
    %v939 = vunpack.c.l.b16 %v248
    %v940 = vunpack.c.h.b16 %v248
    %v941 = vunpack.c.l.b16 %v249
    %v942 = vunpack.c.h.b16 %v249
    %v943 = vunpack.c.l.b16 %v250
    %v944 = vunpack.c.h.b16 %v250
    %v945 = vunpack.c.l.b16 %v251
    %v946 = vunpack.c.h.b16 %v251
    %v947 = vunpack.c.l.b16 %v252
    %v948 = vunpack.c.h.b16 %v252
    %v949 = vunpack.c.l.b16 %v253
    %v950 = vunpack.c.h.b16 %v253
    %v951 = vunpack.c.l.b16 %v254
    %v952 = vunpack.c.h.b16 %v254
    %v953 = vunpack.c.l.b16 %v255
    %v954 = vunpack.c.h.b16 %v255
    %v955 = vunpack.c.l.b16 %v256
    %v956 = vunpack.c.h.b16 %v256
    %v957 = vunpack.c.l.b16 %v257
    %v958 = vunpack.c.h.b16 %v257
    %v959 = vunpack.c.l.b16 %v258
    %v960 = vunpack.c.h.b16 %v258
    %v961 = vunpack.c.l.b16 %v259
    %v962 = vunpack.c.h.b16 %v259
    %v963 = vunpack.c.l.b16 %v260
    %v964 = vunpack.c.h.b16 %v260
    %v965 = vunpack.c.l.b16 %v261
    %v966 = vunpack.c.h.b16 %v261
    %v967 = vunpack.c.l.b16 %v262
    %v968 = vunpack.c.h.b16 %v262
    %v969 = vunpack.c.l.b16 %v263
    %v970 = vunpack.c.h.b16 %v263
    %v971 = vunpack.c.l.b16 %v264
    %v972 = vunpack.c.h.b16 %v264
    %v973 = vunpack.c.l.b16 %v265
    %v974 = vunpack.c.h.b16 %v265
    %v975 = vunpack.c.l.b16 %v266
    %v976 = vunpack.c.h.b16 %v266
    %v977 = vunpack.c.l.b16 %v267
    %v978 = vunpack.c.h.b16 %v267
    %v979 = vpack.c.b16 %v591, %v587
    %v980 = vpack.c.b16 %v592, %v588
    %v981 = vpack.c.b16 %v593, %v589
    %v982 = vpack.c.b16 %v594, %v590
    %v983 = vpack.c.b16 %v599, %v595
    %v984 = vpack.c.b16 %v600, %v596
    %v985 = vpack.c.b16 %v601, %v597
    %v986 = vpack.c.b16 %v602, %v598
    %v987 = vpack.c.b16 %v607, %v603
    %v988 = vpack.c.b16 %v608, %v604
    %v989 = vpack.c.b16 %v609, %v605
    %v990 = vpack.c.b16 %v610, %v606
    %v991 = vpack.c.b16 %v615, %v611
    %v992 = vpack.c.b16 %v616, %v612
    %v993 = vpack.c.b16 %v617, %v613
    %v994 = vpack.c.b16 %v618, %v614
    %v995 = vpack.c.b16 %v623, %v619
    %v996 = vpack.c.b16 %v624, %v620
    %v997 = vpack.c.b16 %v625, %v621
    %v998 = vpack.c.b16 %v626, %v622
    %v999 = vpack.c.b16 %v631, %v627
    %v1000 = vpack.c.b16 %v632, %v628
    %v1001 = vpack.c.b16 %v633, %v629
    %v1002 = vpack.c.b16 %v634, %v630
    %v1003 = vpack.c.b16 %v639, %v635
    %v1004 = vpack.c.b16 %v640, %v636
    %v1005 = vpack.c.b16 %v641, %v637
    %v1006 = vpack.c.b16 %v642, %v638
    %v1007 = vpack.c.b16 %v647, %v643
    %v1008 = vpack.c.b16 %v648, %v644
    %v1009 = vpack.c.b16 %v649, %v645
    %v1010 = vpack.c.b16 %v650, %v646
    %v1011 = vpack.c.b16 %v655, %v651
    %v1012 = vpack.c.b16 %v656, %v652
    %v1013 = vpack.c.b16 %v657, %v653
    %v1014 = vpack.c.b16 %v658, %v654
    %v1015 = vpack.c.b16 %v663, %v659
    %v1016 = vpack.c.b16 %v664, %v660
    %v1017 = vpack.c.b16 %v665, %v661
    %v1018 = vpack.c.b16 %v666, %v662
    %v1019 = vpack.c.b16 %v671, %v667
    %v1020 = vpack.c.b16 %v672, %v668
    %v1021 = vpack.c.b16 %v673, %v669
    %v1022 = vpack.c.b16 %v674, %v670
    %v1023 = vpack.c.b16 %v679, %v675
    %v1024 = vpack.c.b16 %v680, %v676
    %v1025 = vpack.c.b16 %v681, %v677
    %v1026 = vpack.c.b16 %v682, %v678
    %v1027 = vpack.c.b16 %v687, %v683
    %v1028 = vpack.c.b16 %v688, %v684
    %v1029 = vpack.c.b16 %v689, %v685
    %v1030 = vpack.c.b16 %v690, %v686
    %v1031 = vpack.c.b16 %v695, %v691
    %v1032 = vpack.c.b16 %v696, %v692
    %v1033 = vpack.c.b16 %v697, %v693
    %v1034 = vpack.c.b16 %v698, %v694
    %v1035 = vpack.c.b16 %v703, %v699
    %v1036 = vpack.c.b16 %v704, %v700
    %v1037 = vpack.c.b16 %v705, %v701
    %v1038 = vpack.c.b16 %v706, %v702
    %v1039 = vpack.c.b16 %v711, %v707
    %v1040 = vpack.c.b16 %v712, %v708
    %v1041 = vpack.c.b16 %v713, %v709
    %v1042 = vpack.c.b16 %v714, %v710
    %v1043 = vpack.c.b16 %v719, %v715
    %v1044 = vpack.c.b16 %v720, %v716
    %v1045 = vpack.c.b16 %v721, %v717
    %v1046 = vpack.c.b16 %v722, %v718
    %v1047 = vpack.c.b16 %v727, %v723
    %v1048 = vpack.c.b16 %v728, %v724
    %v1049 = vpack.c.b16 %v729, %v725
    %v1050 = vpack.c.b16 %v730, %v726
    %v1051 = vpack.c.b16 %v735, %v731
    %v1052 = vpack.c.b16 %v736, %v732
    %v1053 = vpack.c.b16 %v737, %v733
    %v1054 = vpack.c.b16 %v738, %v734
    %v1055 = vpack.c.b16 %v743, %v739
    %v1056 = vpack.c.b16 %v744, %v740
    %v1057 = vpack.c.b16 %v745, %v741
    %v1058 = vpack.c.b16 %v746, %v742
    %v1059 = vpack.c.b16 %v751, %v747
    %v1060 = vpack.c.b16 %v752, %v748
    %v1061 = vpack.c.b16 %v753, %v749
    %v1062 = vpack.c.b16 %v754, %v750
    %v1063 = vpack.c.b16 %v759, %v755
    %v1064 = vpack.c.b16 %v760, %v756
    %v1065 = vpack.c.b16 %v761, %v757
    %v1066 = vpack.c.b16 %v762, %v758
    %v1067 = vpack.c.b16 %v767, %v763
    %v1068 = vpack.c.b16 %v768, %v764
    %v1069 = vpack.c.b16 %v769, %v765
    %v1070 = vpack.c.b16 %v770, %v766
    %v1071 = vpack.c.b16 %v775, %v771
    %v1072 = vpack.c.b16 %v776, %v772
    %v1073 = vpack.c.b16 %v777, %v773
    %v1074 = vpack.c.b16 %v778, %v774
    %v1075 = vpack.c.b16 %v783, %v779
    %v1076 = vpack.c.b16 %v784, %v780
    %v1077 = vpack.c.b16 %v785, %v781
    %v1078 = vpack.c.b16 %v786, %v782
    %v1079 = vpack.c.b16 %v791, %v787
    %v1080 = vpack.c.b16 %v792, %v788
    %v1081 = vpack.c.b16 %v793, %v789
    %v1082 = vpack.c.b16 %v794, %v790
    %v1083 = vpack.c.b16 %v799, %v795
    %v1084 = vpack.c.b16 %v800, %v796
    %v1085 = vpack.c.b16 %v801, %v797
    %v1086 = vpack.c.b16 %v802, %v798
    %v1087 = vpack.c.b16 %v807, %v803
    %v1088 = vpack.c.b16 %v808, %v804
    %v1089 = vpack.c.b16 %v809, %v805
    %v1090 = vpack.c.b16 %v810, %v806
    %v1091 = vpack.c.b16 %v815, %v811
    %v1092 = vpack.c.b16 %v816, %v812
    %v1093 = vpack.c.b16 %v817, %v813
    %v1094 = vpack.c.b16 %v818, %v814
    %v1095 = vpack.c.b16 %v823, %v819
    %v1096 = vpack.c.b16 %v824, %v820
    %v1097 = vpack.c.b16 %v825, %v821
    %v1098 = vpack.c.b16 %v826, %v822
    %v1099 = vpack.c.b16 %v831, %v827
    %v1100 = vpack.c.b16 %v832, %v828
    %v1101 = vpack.c.b16 %v833, %v829
    %v1102 = vpack.c.b16 %v834, %v830
    %v1103 = vpack.c.b16 %v839, %v835
    %v1104 = vpack.c.b16 %v840, %v836
    %v1105 = vpack.c.b16 %v841, %v837
    %v1106 = vpack.c.b16 %v842, %v838
    %v1107 = vpack.c.b16 %v847, %v843
    %v1108 = vpack.c.b16 %v848, %v844
    %v1109 = vpack.c.b16 %v849, %v845
    %v1110 = vpack.c.b16 %v850, %v846
    %v1111 = vpack.c.b16 %v855, %v851
    %v1112 = vpack.c.b16 %v856, %v852
    %v1113 = vpack.c.b16 %v857, %v853
    %v1114 = vpack.c.b16 %v858, %v854
    %v1115 = vpack.c.b16 %v863, %v859
    %v1116 = vpack.c.b16 %v864, %v860
    %v1117 = vpack.c.b16 %v865, %v861
    %v1118 = vpack.c.b16 %v866, %v862
    %v1119 = vpack.c.b16 %v871, %v867
    %v1120 = vpack.c.b16 %v872, %v868
    %v1121 = vpack.c.b16 %v873, %v869
    %v1122 = vpack.c.b16 %v874, %v870
    %v1123 = vpack.c.b16 %v879, %v875
    %v1124 = vpack.c.b16 %v880, %v876
    %v1125 = vpack.c.b16 %v881, %v877
    %v1126 = vpack.c.b16 %v882, %v878
    %v1127 = vpack.c.b16 %v887, %v883
    %v1128 = vpack.c.b16 %v888, %v884
    %v1129 = vpack.c.b16 %v889, %v885
    %v1130 = vpack.c.b16 %v890, %v886
    %v1131 = vpack.c.b16 %v895, %v891
    %v1132 = vpack.c.b16 %v896, %v892
    %v1133 = vpack.c.b16 %v897, %v893
    %v1134 = vpack.c.b16 %v898, %v894
    %v1135 = vpack.c.b16 %v903, %v899
    %v1136 = vpack.c.b16 %v904, %v900
    %v1137 = vpack.c.b16 %v905, %v901
    %v1138 = vpack.c.b16 %v906, %v902
    %v1139 = vpack.c.b16 %v911, %v907
    %v1140 = vpack.c.b16 %v912, %v908
    %v1141 = vpack.c.b16 %v913, %v909
    %v1142 = vpack.c.b16 %v914, %v910
    %v1143 = vpack.c.b16 %v919, %v915
    %v1144 = vpack.c.b16 %v920, %v916
    %v1145 = vpack.c.b16 %v921, %v917
    %v1146 = vpack.c.b16 %v922, %v918
    %v1147 = vpack.c.b16 %v927, %v923
    %v1148 = vpack.c.b16 %v928, %v924
    %v1149 = vpack.c.b16 %v929, %v925
    %v1150 = vpack.c.b16 %v930, %v926
    %v1151 = vpack.c.b16 %v935, %v931
    %v1152 = vpack.c.b16 %v936, %v932
    %v1153 = vpack.c.b16 %v937, %v933
    %v1154 = vpack.c.b16 %v938, %v934
    %v1155 = vpack.c.b16 %v943, %v939
    %v1156 = vpack.c.b16 %v944, %v940
    %v1157 = vpack.c.b16 %v945, %v941
    %v1158 = vpack.c.b16 %v946, %v942
    %v1159 = vpack.c.b16 %v951, %v947
    %v1160 = vpack.c.b16 %v952, %v948
    %v1161 = vpack.c.b16 %v953, %v949
    %v1162 = vpack.c.b16 %v954, %v950
    %v1163 = vpack.c.b16 %v959, %v955
    %v1164 = vpack.c.b16 %v960, %v956
    %v1165 = vpack.c.b16 %v961, %v957
    %v1166 = vpack.c.b16 %v962, %v958
    %v1167 = vpack.c.b16 %v967, %v963
    %v1168 = vpack.c.b16 %v968, %v964
    %v1169 = vpack.c.b16 %v969, %v965
    %v1170 = vpack.c.b16 %v970, %v966
    %v1171 = vpack.c.b16 %v975, %v971
    %v1172 = vpack.c.b16 %v976, %v972
    %v1173 = vpack.c.b16 %v977, %v973
    %v1174 = vpack.c.b16 %v978, %v974
    %vm1371 = vcmask 130048
    %v1373 = vsel %vm1371, %v68, 0
    %1375 = vmatprep.subr.bf16.mxu0 %v1008
    %1376 = vmatpush1.bf16.msra.mxu0 %v1007
    %1377 = vmatprep.subr.bf16.mxu0 %v1004
    %1378 = vmatpush1.bf16.msra.mxu0 %v1003
    %1379 = vmatprep.subr.bf16.mxu0 %v1000
    %1380 = vmatpush1.bf16.msra.mxu0 %v999
    %1381 = vmatprep.subr.bf16.mxu0 %v996
    %1382 = vmatpush1.bf16.msra.mxu0 %v995
    %1383 = vmatprep.subr.bf16.mxu0 %v992
    %1384 = vmatpush1.bf16.msra.mxu0 %v991
    %1385 = vmatprep.subr.bf16.mxu0 %v988
    %1386 = vmatpush1.bf16.msra.mxu0 %v987
    %1387 = vmatprep.subr.bf16.mxu0 %v984
    %1388 = vmatpush1.bf16.msra.mxu0 %v983
    %1389 = vmatprep.subr.bf16.mxu0 %v980
    %1390 = vmatpush1.bf16.msra.mxu0 %v979
    %1391 = vmatprep.subr.bf16.mxu0 %v1040
    %1392 = vmatpush2.bf16.msra.mxu0 %v1039
    %1393 = vmatprep.subr.bf16.mxu0 %v1036
    %1394 = vmatpush2.bf16.msra.mxu0 %v1035
    %1395 = vmatprep.subr.bf16.mxu0 %v1032
    %1396 = vmatpush2.bf16.msra.mxu0 %v1031
    %1397 = vmatprep.subr.bf16.mxu0 %v1028
    %1398 = vmatpush2.bf16.msra.mxu0 %v1027
    %1399 = vmatprep.subr.bf16.mxu0 %v1024
    %1400 = vmatpush2.bf16.msra.mxu0 %v1023
    %1401 = vmatprep.subr.bf16.mxu0 %v1020
    %1402 = vmatpush2.bf16.msra.mxu0 %v1019
    %1403 = vmatprep.subr.bf16.mxu0 %v1016
    %1404 = vmatpush2.bf16.msra.mxu0 %v1015
    %1405 = vmatprep.subr.bf16.mxu0 %v1012
    %1406 = vmatpush2.bf16.msra.mxu0 %v1011
    %1407 = vmatprep.mubr.bf16.mxu0 %v63
    %1408 = vmatmul.mubr.bf16.gmra.mxu0 %v62
    %v1409 = vpop.f32.mrf.mxu0
    %v1410 = vadd.f32 %v340, %v1409
    %v1411 = vpop.f32.mrf.mxu0
    %v1412 = vadd.f32 %v342, %v1411
    %v1413 = vpop.f32.mrf.mxu0
    %v1414 = vadd.f32 %v344, %v1413
    %v1415 = vpop.f32.mrf.mxu0
    %v1416 = vadd.f32 %v346, %v1415
    %1417 = vdwg.mxu0
    %1418 = vmatprep.subr.bf16.mxu0 %v1072
    %1419 = vmatpush1.bf16.msra.mxu0 %v1071
    %1420 = vmatprep.subr.bf16.mxu0 %v1068
    %1421 = vmatpush1.bf16.msra.mxu0 %v1067
    %1422 = vmatprep.subr.bf16.mxu0 %v1064
    %1423 = vmatpush1.bf16.msra.mxu0 %v1063
    %1424 = vmatprep.subr.bf16.mxu0 %v1060
    %1425 = vmatpush1.bf16.msra.mxu0 %v1059
    %1426 = vmatprep.subr.bf16.mxu0 %v1056
    %1427 = vmatpush1.bf16.msra.mxu0 %v1055
    %1428 = vmatprep.subr.bf16.mxu0 %v1052
    %1429 = vmatpush1.bf16.msra.mxu0 %v1051
    %1430 = vmatprep.subr.bf16.mxu0 %v1048
    %1431 = vmatpush1.bf16.msra.mxu0 %v1047
    %1432 = vmatprep.subr.bf16.mxu0 %v1044
    %1433 = vmatpush1.bf16.msra.mxu0 %v1043
    %1434 = vmatprep.subr.bf16.mxu0 %v1104
    %1435 = vmatpush2.bf16.msra.mxu0 %v1103
    %1436 = vmatprep.subr.bf16.mxu0 %v1100
    %1437 = vmatpush2.bf16.msra.mxu0 %v1099
    %1438 = vmatprep.subr.bf16.mxu0 %v1096
    %1439 = vmatpush2.bf16.msra.mxu0 %v1095
    %1440 = vmatprep.subr.bf16.mxu0 %v1092
    %1441 = vmatpush2.bf16.msra.mxu0 %v1091
    %1442 = vmatprep.subr.bf16.mxu0 %v1088
    %1443 = vmatpush2.bf16.msra.mxu0 %v1087
    %1444 = vmatprep.subr.bf16.mxu0 %v1084
    %1445 = vmatpush2.bf16.msra.mxu0 %v1083
    %1446 = vmatprep.subr.bf16.mxu0 %v1080
    %1447 = vmatpush2.bf16.msra.mxu0 %v1079
    %1448 = vmatprep.subr.bf16.mxu0 %v1076
    %1449 = vmatpush2.bf16.msra.mxu0 %v1075
    %1450 = vmatprep.mubr.bf16.mxu0 %v65
    %1451 = vmatmul.mubr.bf16.gmra.mxu0 %v64
    %v1452 = vpop.f32.mrf.mxu0
    %v1453 = vadd.f32 %v1410, %v1452
    %v1454 = vpop.f32.mrf.mxu0
    %v1455 = vadd.f32 %v1412, %v1454
    %v1456 = vpop.f32.mrf.mxu0
    %v1457 = vadd.f32 %v1414, %v1456
    %v1458 = vpop.f32.mrf.mxu0
    %v1459 = vadd.f32 %v1416, %v1458
    %1460 = vdwg.mxu0
    %1461 = vmatprep.subr.bf16.mxu0 %v1136
    %1462 = vmatpush1.bf16.msra.mxu0 %v1135
    %1463 = vmatprep.subr.bf16.mxu0 %v1132
    %1464 = vmatpush1.bf16.msra.mxu0 %v1131
    %1465 = vmatprep.subr.bf16.mxu0 %v1128
    %1466 = vmatpush1.bf16.msra.mxu0 %v1127
    %1467 = vmatprep.subr.bf16.mxu0 %v1124
    %1468 = vmatpush1.bf16.msra.mxu0 %v1123
    %1469 = vmatprep.subr.bf16.mxu0 %v1120
    %1470 = vmatpush1.bf16.msra.mxu0 %v1119
    %1471 = vmatprep.subr.bf16.mxu0 %v1116
    %1472 = vmatpush1.bf16.msra.mxu0 %v1115
    %1473 = vmatprep.subr.bf16.mxu0 %v1112
    %1474 = vmatpush1.bf16.msra.mxu0 %v1111
    %1475 = vmatprep.subr.bf16.mxu0 %v1108
    %1476 = vmatpush1.bf16.msra.mxu0 %v1107
    %1477 = vmatprep.subr.bf16.mxu0 %v1168
    %1478 = vmatpush2.bf16.msra.mxu0 %v1167
    %1479 = vmatprep.subr.bf16.mxu0 %v1164
    %1480 = vmatpush2.bf16.msra.mxu0 %v1163
    %1481 = vmatprep.subr.bf16.mxu0 %v1160
    %1482 = vmatpush2.bf16.msra.mxu0 %v1159
    %1483 = vmatprep.subr.bf16.mxu0 %v1156
    %1484 = vmatpush2.bf16.msra.mxu0 %v1155
    %1485 = vmatprep.subr.bf16.mxu0 %v1152
    %1486 = vmatpush2.bf16.msra.mxu0 %v1151
    %1487 = vmatprep.subr.bf16.mxu0 %v1148
    %1488 = vmatpush2.bf16.msra.mxu0 %v1147
    %1489 = vmatprep.subr.bf16.mxu0 %v1144
    %1490 = vmatpush2.bf16.msra.mxu0 %v1143
    %1491 = vmatprep.subr.bf16.mxu0 %v1140
    %1492 = vmatpush2.bf16.msra.mxu0 %v1139
    %1493 = vmatprep.mubr.bf16.mxu0 %v67
    %1494 = vmatmul.mubr.bf16.gmra.mxu0 %v66
    %v1495 = vpop.f32.mrf.mxu0
    %v1496 = vadd.f32 %v1453, %v1495
    %v1497 = vpop.f32.mrf.mxu0
    %v1498 = vadd.f32 %v1455, %v1497
    %v1499 = vpop.f32.mrf.mxu0
    %v1500 = vadd.f32 %v1457, %v1499
    %v1501 = vpop.f32.mrf.mxu0
    %v1502 = vadd.f32 %v1459, %v1501
    %1503 = vdwg.mxu0
    %1504 = vmatprep.subr.bf16.mxu0 0
    %1505 = vmatpush1.bf16.msra.mxu0 0
    %1506 = vmatprep.subr.bf16.mxu0 0
    %1507 = vmatpush1.bf16.msra.mxu0 0
    %1508 = vmatprep.subr.bf16.mxu0 0
    %1509 = vmatpush1.bf16.msra.mxu0 0
    %1510 = vmatprep.subr.bf16.mxu0 0
    %1511 = vmatpush1.bf16.msra.mxu0 0
    %1512 = vmatprep.subr.bf16.mxu0 0
    %1513 = vmatpush1.bf16.msra.mxu0 0
    %1514 = vmatprep.subr.bf16.mxu0 0
    %1515 = vmatpush1.bf16.msra.mxu0 0
    %1516 = vmatprep.subr.bf16.mxu0 0
    %1517 = vmatpush1.bf16.msra.mxu0 0
    %1518 = vmatprep.subr.bf16.mxu0 %v1172
    %1519 = vmatpush1.bf16.msra.mxu0 %v1171
    %1520 = vmatprep.subr.bf16.mxu0 0
    %1521 = vmatpush2.bf16.msra.mxu0 0
    %1522 = vmatprep.subr.bf16.mxu0 0
    %1523 = vmatpush2.bf16.msra.mxu0 0
    %1524 = vmatprep.subr.bf16.mxu0 0
    %1525 = vmatpush2.bf16.msra.mxu0 0
    %1526 = vmatprep.subr.bf16.mxu0 0
    %1527 = vmatpush2.bf16.msra.mxu0 0
    %1528 = vmatprep.subr.bf16.mxu0 0
    %1529 = vmatpush2.bf16.msra.mxu0 0
    %1530 = vmatprep.subr.bf16.mxu0 0
    %1531 = vmatpush2.bf16.msra.mxu0 0
    %1532 = vmatprep.subr.bf16.mxu0 0
    %1533 = vmatpush2.bf16.msra.mxu0 0
    %1534 = vmatprep.subr.bf16.mxu0 0
    %1535 = vmatpush2.bf16.msra.mxu0 0
    %1536 = vmatprep.mubr.bf16.mxu0 0
    %1537 = vmatmul.mubr.bf16.gmra.mxu0 %v1373
    %v1538 = vpop.f32.mrf.mxu0
    %v1539 = vadd.f32 %v1496, %v1538
    %v1540 = vpop.f32.mrf.mxu0
    %v1541 = vadd.f32 %v1498, %v1540
    %v1542 = vpop.f32.mrf.mxu0
    %v1543 = vadd.f32 %v1500, %v1542
    %v1544 = vpop.f32.mrf.mxu0
    %v1545 = vadd.f32 %v1502, %v1544
    %1546 = vdwg.mxu0
    %1547 = vmatprep.subr.bf16.mxu0 %v1010
    %1548 = vmatpush1.bf16.msra.mxu0 %v1009
    %1549 = vmatprep.subr.bf16.mxu0 %v1006
    %1550 = vmatpush1.bf16.msra.mxu0 %v1005
    %1551 = vmatprep.subr.bf16.mxu0 %v1002
    %1552 = vmatpush1.bf16.msra.mxu0 %v1001
    %1553 = vmatprep.subr.bf16.mxu0 %v998
    %1554 = vmatpush1.bf16.msra.mxu0 %v997
    %1555 = vmatprep.subr.bf16.mxu0 %v994
    %1556 = vmatpush1.bf16.msra.mxu0 %v993
    %1557 = vmatprep.subr.bf16.mxu0 %v990
    %1558 = vmatpush1.bf16.msra.mxu0 %v989
    %1559 = vmatprep.subr.bf16.mxu0 %v986
    %1560 = vmatpush1.bf16.msra.mxu0 %v985
    %1561 = vmatprep.subr.bf16.mxu0 %v982
    %1562 = vmatpush1.bf16.msra.mxu0 %v981
    %1563 = vmatprep.subr.bf16.mxu0 %v1042
    %1564 = vmatpush2.bf16.msra.mxu0 %v1041
    %1565 = vmatprep.subr.bf16.mxu0 %v1038
    %1566 = vmatpush2.bf16.msra.mxu0 %v1037
    %1567 = vmatprep.subr.bf16.mxu0 %v1034
    %1568 = vmatpush2.bf16.msra.mxu0 %v1033
    %1569 = vmatprep.subr.bf16.mxu0 %v1030
    %1570 = vmatpush2.bf16.msra.mxu0 %v1029
    %1571 = vmatprep.subr.bf16.mxu0 %v1026
    %1572 = vmatpush2.bf16.msra.mxu0 %v1025
    %1573 = vmatprep.subr.bf16.mxu0 %v1022
    %1574 = vmatpush2.bf16.msra.mxu0 %v1021
    %1575 = vmatprep.subr.bf16.mxu0 %v1018
    %1576 = vmatpush2.bf16.msra.mxu0 %v1017
    %1577 = vmatprep.subr.bf16.mxu0 %v1014
    %1578 = vmatpush2.bf16.msra.mxu0 %v1013
    %1579 = vmatprep.mubr.bf16.mxu0 %v63
    %1580 = vmatmul.mubr.bf16.gmra.mxu0 %v62
    %v1581 = vpop.f32.mrf.mxu0
    %v1582 = vadd.f32 %v383, %v1581
    %v1583 = vpop.f32.mrf.mxu0
    %v1584 = vadd.f32 %v385, %v1583
    %v1585 = vpop.f32.mrf.mxu0
    %v1586 = vadd.f32 %v387, %v1585
    %v1587 = vpop.f32.mrf.mxu0
    %v1588 = vadd.f32 %v389, %v1587
    %1589 = vdwg.mxu0
    %1590 = vmatprep.subr.bf16.mxu0 %v1074
    %1591 = vmatpush1.bf16.msra.mxu0 %v1073
    %1592 = vmatprep.subr.bf16.mxu0 %v1070
    %1593 = vmatpush1.bf16.msra.mxu0 %v1069
    %1594 = vmatprep.subr.bf16.mxu0 %v1066
    %1595 = vmatpush1.bf16.msra.mxu0 %v1065
    %1596 = vmatprep.subr.bf16.mxu0 %v1062
    %1597 = vmatpush1.bf16.msra.mxu0 %v1061
    %1598 = vmatprep.subr.bf16.mxu0 %v1058
    %1599 = vmatpush1.bf16.msra.mxu0 %v1057
    %1600 = vmatprep.subr.bf16.mxu0 %v1054
    %1601 = vmatpush1.bf16.msra.mxu0 %v1053
    %1602 = vmatprep.subr.bf16.mxu0 %v1050
    %1603 = vmatpush1.bf16.msra.mxu0 %v1049
    %1604 = vmatprep.subr.bf16.mxu0 %v1046
    %1605 = vmatpush1.bf16.msra.mxu0 %v1045
    %1606 = vmatprep.subr.bf16.mxu0 %v1106
    %1607 = vmatpush2.bf16.msra.mxu0 %v1105
    %1608 = vmatprep.subr.bf16.mxu0 %v1102
    %1609 = vmatpush2.bf16.msra.mxu0 %v1101
    %1610 = vmatprep.subr.bf16.mxu0 %v1098
    %1611 = vmatpush2.bf16.msra.mxu0 %v1097
    %1612 = vmatprep.subr.bf16.mxu0 %v1094
    %1613 = vmatpush2.bf16.msra.mxu0 %v1093
    %1614 = vmatprep.subr.bf16.mxu0 %v1090
    %1615 = vmatpush2.bf16.msra.mxu0 %v1089
    %1616 = vmatprep.subr.bf16.mxu0 %v1086
    %1617 = vmatpush2.bf16.msra.mxu0 %v1085
    %1618 = vmatprep.subr.bf16.mxu0 %v1082
    %1619 = vmatpush2.bf16.msra.mxu0 %v1081
    %1620 = vmatprep.subr.bf16.mxu0 %v1078
    %1621 = vmatpush2.bf16.msra.mxu0 %v1077
    %1622 = vmatprep.mubr.bf16.mxu0 %v65
    %1623 = vmatmul.mubr.bf16.gmra.mxu0 %v64
    %v1624 = vpop.f32.mrf.mxu0
    %v1625 = vadd.f32 %v1582, %v1624
    %v1626 = vpop.f32.mrf.mxu0
    %v1627 = vadd.f32 %v1584, %v1626
    %v1628 = vpop.f32.mrf.mxu0
    %v1629 = vadd.f32 %v1586, %v1628
    %v1630 = vpop.f32.mrf.mxu0
    %v1631 = vadd.f32 %v1588, %v1630
    %1632 = vdwg.mxu0
    %1633 = vmatprep.subr.bf16.mxu0 %v1138
    %1634 = vmatpush1.bf16.msra.mxu0 %v1137
    %1635 = vmatprep.subr.bf16.mxu0 %v1134
    %1636 = vmatpush1.bf16.msra.mxu0 %v1133
    %1637 = vmatprep.subr.bf16.mxu0 %v1130
    %1638 = vmatpush1.bf16.msra.mxu0 %v1129
    %1639 = vmatprep.subr.bf16.mxu0 %v1126
    %1640 = vmatpush1.bf16.msra.mxu0 %v1125
    %1641 = vmatprep.subr.bf16.mxu0 %v1122
    %1642 = vmatpush1.bf16.msra.mxu0 %v1121
    %1643 = vmatprep.subr.bf16.mxu0 %v1118
    %1644 = vmatpush1.bf16.msra.mxu0 %v1117
    %1645 = vmatprep.subr.bf16.mxu0 %v1114
    %1646 = vmatpush1.bf16.msra.mxu0 %v1113
    %1647 = vmatprep.subr.bf16.mxu0 %v1110
    %1648 = vmatpush1.bf16.msra.mxu0 %v1109
    %1649 = vmatprep.subr.bf16.mxu0 %v1170
    %1650 = vmatpush2.bf16.msra.mxu0 %v1169
    %1651 = vmatprep.subr.bf16.mxu0 %v1166
    %1652 = vmatpush2.bf16.msra.mxu0 %v1165
    %1653 = vmatprep.subr.bf16.mxu0 %v1162
    %1654 = vmatpush2.bf16.msra.mxu0 %v1161
    %1655 = vmatprep.subr.bf16.mxu0 %v1158
    %1656 = vmatpush2.bf16.msra.mxu0 %v1157
    %1657 = vmatprep.subr.bf16.mxu0 %v1154
    %1658 = vmatpush2.bf16.msra.mxu0 %v1153
    %1659 = vmatprep.subr.bf16.mxu0 %v1150
    %1660 = vmatpush2.bf16.msra.mxu0 %v1149
    %1661 = vmatprep.subr.bf16.mxu0 %v1146
    %1662 = vmatpush2.bf16.msra.mxu0 %v1145
    %1663 = vmatprep.subr.bf16.mxu0 %v1142
    %1664 = vmatpush2.bf16.msra.mxu0 %v1141
    %1665 = vmatprep.mubr.bf16.mxu0 %v67
    %1666 = vmatmul.mubr.bf16.gmra.mxu0 %v66
    %v1667 = vpop.f32.mrf.mxu0
    %v1668 = vadd.f32 %v1625, %v1667
    %v1669 = vpop.f32.mrf.mxu0
    %v1670 = vadd.f32 %v1627, %v1669
    %v1671 = vpop.f32.mrf.mxu0
    %v1672 = vadd.f32 %v1629, %v1671
    %v1673 = vpop.f32.mrf.mxu0
    %v1674 = vadd.f32 %v1631, %v1673
    %1675 = vdwg.mxu0
    %1676 = vmatprep.subr.bf16.mxu0 0
    %1677 = vmatpush1.bf16.msra.mxu0 0
    %1678 = vmatprep.subr.bf16.mxu0 0
    %1679 = vmatpush1.bf16.msra.mxu0 0
    %1680 = vmatprep.subr.bf16.mxu0 0
    %1681 = vmatpush1.bf16.msra.mxu0 0
    %1682 = vmatprep.subr.bf16.mxu0 0
    %1683 = vmatpush1.bf16.msra.mxu0 0
    %1684 = vmatprep.subr.bf16.mxu0 0
    %1685 = vmatpush1.bf16.msra.mxu0 0
    %1686 = vmatprep.subr.bf16.mxu0 0
    %1687 = vmatpush1.bf16.msra.mxu0 0
    %1688 = vmatprep.subr.bf16.mxu0 0
    %1689 = vmatpush1.bf16.msra.mxu0 0
    %1690 = vmatprep.subr.bf16.mxu0 %v1174
    %1691 = vmatpush1.bf16.msra.mxu0 %v1173
    %1692 = vmatprep.subr.bf16.mxu0 0
    %1693 = vmatpush2.bf16.msra.mxu0 0
    %1694 = vmatprep.subr.bf16.mxu0 0
    %1695 = vmatpush2.bf16.msra.mxu0 0
    %1696 = vmatprep.subr.bf16.mxu0 0
    %1697 = vmatpush2.bf16.msra.mxu0 0
    %1698 = vmatprep.subr.bf16.mxu0 0
    %1699 = vmatpush2.bf16.msra.mxu0 0
    %1700 = vmatprep.subr.bf16.mxu0 0
    %1701 = vmatpush2.bf16.msra.mxu0 0
    %1702 = vmatprep.subr.bf16.mxu0 0
    %1703 = vmatpush2.bf16.msra.mxu0 0
    %1704 = vmatprep.subr.bf16.mxu0 0
    %1705 = vmatpush2.bf16.msra.mxu0 0
    %1706 = vmatprep.subr.bf16.mxu0 0
    %1707 = vmatpush2.bf16.msra.mxu0 0
    %1708 = vmatprep.mubr.bf16.mxu0 0
    %1709 = vmatmul.mubr.bf16.gmra.mxu0 %v1373
    %v1710 = vpop.f32.mrf.mxu0
    %v1711 = vadd.f32 %v1668, %v1710
    %v1712 = vpop.f32.mrf.mxu0
    %v1713 = vadd.f32 %v1670, %v1712
    %v1714 = vpop.f32.mrf.mxu0
    %v1715 = vadd.f32 %v1672, %v1714
    %v1716 = vpop.f32.mrf.mxu0
    %v1717 = vadd.f32 %v1674, %v1716
    %1718 = vdwg.mxu0
    %v1719 = vld [vmem:[%s4] sm:$0xf]
    %v1721 = vlaneseq
    %v1722 = vshrl.u32 %v1721, 7
    %v1723 = vsub.s32 0, %v1722
    %v1724 = vrot.slane %v1719, %v1723
    %v1725 = vlaneseq
    %v1726 = vshrl.u32 %v1725, 7
    %v1727 = vsub.s32 1, %v1726
    %v1728 = vrot.slane %v1719, %v1727
    %v1729 = vlaneseq
    %v1730 = vshrl.u32 %v1729, 7
    %v1731 = vsub.s32 2, %v1730
    %v1732 = vrot.slane %v1719, %v1731
    %v1733 = vlaneseq
    %v1734 = vshrl.u32 %v1733, 7
    %v1735 = vsub.s32 3, %v1734
    %v1736 = vrot.slane %v1719, %v1735
    %v1741 = vadd.f32 %v1539, %v1724
    %v1742 = vadd.f32 %v1541, %v1728
    %v1743 = vadd.f32 %v1711, %v1732
    %v1744 = vadd.f32 %v1713, %v1736
    %v1745 = vadd.f32 %v1543, %v1724
    %v1746 = vadd.f32 %v1545, %v1728
    %v1747 = vadd.f32 %v1715, %v1732
    %v1748 = vadd.f32 %v1717, %v1736
    %vm1749 = vcmp.gt.f32.partialorder %v1741, 0.0
    %vm1750 = vcmp.gt.f32.partialorder %v1742, 0.0
    %vm1751 = vcmp.gt.f32.partialorder %v1743, 0.0
    %vm1752 = vcmp.gt.f32.partialorder %v1744, 0.0
    %vm1753 = vcmp.gt.f32.partialorder %v1745, 0.0
    %vm1754 = vcmp.gt.f32.partialorder %v1746, 0.0
    %vm1755 = vcmp.gt.f32.partialorder %v1747, 0.0
    %vm1756 = vcmp.gt.f32.partialorder %v1748, 0.0
    %v1757 = vmul.f32 %v1741, 0.2
    %v1758 = vmul.f32 %v1742, 0.2
    %v1759 = vmul.f32 %v1743, 0.2
    %v1760 = vmul.f32 %v1744, 0.2
    %v1761 = vmul.f32 %v1745, 0.2
    %v1762 = vmul.f32 %v1746, 0.2
    %v1763 = vmul.f32 %v1747, 0.2
    %v1764 = vmul.f32 %v1748, 0.2
    %v1765 = vsel %vm1749, %v1741, %v1757
    %v1766 = vsel %vm1750, %v1742, %v1758
    %v1767 = vsel %vm1751, %v1743, %v1759
    %v1768 = vsel %vm1752, %v1744, %v1760
    %v1769 = vsel %vm1753, %v1745, %v1761
    %v1770 = vsel %vm1754, %v1746, %v1762
    %v1771 = vsel %vm1755, %v1747, %v1763
    %v1772 = vsel %vm1756, %v1748, %v1764
    %v1773 = vpack.c.bf16 %v1769, %v1765
    %v1774 = vpack.c.bf16 %v1770, %v1766
    %v1775 = vpack.c.bf16 %v1771, %v1767
    %v1776 = vpack.c.bf16 %v1772, %v1768
    %v1777 = vld [vmem:[%s5] sm:$0xff]
    %v1778 = vld [vmem:[%s5 + $0x8] sm:$0xff]
    %v1779 = vld [vmem:[%s5 + $0x10] sm:$0xff]
    %v1780 = vld [vmem:[%s5 + $0x18] sm:$0xff]
    %v1781 = vld [vmem:[%s5 + $0x20] sm:$0xff]
    %v1782 = vld [vmem:[%s5 + $0x28] sm:$0xff]
    %v1783 = vld [vmem:[%s5 + $0x30] sm:$0xff]
    %v1784 = vld [vmem:[%s5 + $0x38] sm:$0xff]
    %v1785 = vld [vmem:[%s5 + $0x40] sm:$0xff]
    %v1786 = vld [vmem:[%s5 + $0x48] sm:$0xff]
    %v1787 = vld [vmem:[%s5 + $0x50] sm:$0xff]
    %v1788 = vld [vmem:[%s5 + $0x58] sm:$0xff]
    %v1789 = vld [vmem:[%s5 + $0x60] sm:$0xff]
    %v1790 = vld [vmem:[%s5 + $0x68] sm:$0xff]
    %v1791 = vld [vmem:[%s5 + $0x70] sm:$0xff]
    %v1792 = vld [vmem:[%s5 + $0x78] sm:$0xff]
    %v1793 = vld [vmem:[%s5 + $0x80] sm:$0xff]
    %v1794 = vld [vmem:[%s5 + $0x88] sm:$0xff]
    %v1795 = vld [vmem:[%s5 + $0x90] sm:$0xff]
    %v1796 = vld [vmem:[%s5 + $0x98] sm:$0xff]
    %v1797 = vld [vmem:[%s5 + $0xa0] sm:$0xff]
    %v1798 = vld [vmem:[%s5 + $0xa8] sm:$0xff]
    %v1799 = vld [vmem:[%s5 + $0xb0] sm:$0xff]
    %v1800 = vld [vmem:[%s5 + $0xb8] sm:$0xff]
    %v1801 = vld [vmem:[%s5 + $0xc0] sm:$0xff]
    %v1802 = vld [vmem:[%s5 + $0xc8] sm:$0xff]
    %v1803 = vld [vmem:[%s5 + $0xd0] sm:$0xff]
    %v1804 = vld [vmem:[%s5 + $0xd8] sm:$0xff]
    %v1805 = vld [vmem:[%s5 + $0xe0] sm:$0xff]
    %v1806 = vld [vmem:[%s5 + $0xe8] sm:$0xff]
    %v1807 = vld [vmem:[%s5 + $0xf0] sm:$0xff]
    %v1808 = vld [vmem:[%s5 + $0xf8] sm:$0xff]
    %v1809 = vld [vmem:[%s5 + $0x100] sm:$0xff]
    %v1810 = vld [vmem:[%s5 + $0x108] sm:$0xff]
    %v1811 = vld [vmem:[%s5 + $0x110] sm:$0xff]
    %v1812 = vld [vmem:[%s5 + $0x118] sm:$0xff]
    %v1813 = vld [vmem:[%s5 + $0x120] sm:$0xff]
    %v1814 = vld [vmem:[%s5 + $0x128] sm:$0xff]
    %v1815 = vld [vmem:[%s5 + $0x130] sm:$0xff]
    %v1816 = vld [vmem:[%s5 + $0x138] sm:$0xff]
    %v1817 = vld [vmem:[%s5 + $0x140] sm:$0xff]
    %v1818 = vld [vmem:[%s5 + $0x148] sm:$0xff]
    %v1819 = vld [vmem:[%s5 + $0x150] sm:$0xff]
    %v1820 = vld [vmem:[%s5 + $0x158] sm:$0xff]
    %v1821 = vld [vmem:[%s5 + $0x160] sm:$0xff]
    %v1822 = vld [vmem:[%s5 + $0x168] sm:$0xff]
    %v1823 = vld [vmem:[%s5 + $0x170] sm:$0xff]
    %v1824 = vld [vmem:[%s5 + $0x178] sm:$0xff]
    %v1825 = vld [vmem:[%s5 + $0x180] sm:$0xff]
    %v1826 = vld [vmem:[%s5 + $0x188] sm:$0xff]
    %v1827 = vld [vmem:[%s5 + $0x190] sm:$0xff]
    %v1828 = vld [vmem:[%s5 + $0x198] sm:$0xff]
    %v1829 = vld [vmem:[%s5 + $0x1a0] sm:$0xff]
    %v1830 = vld [vmem:[%s5 + $0x1a8] sm:$0xff]
    %v1831 = vld [vmem:[%s5 + $0x1b0] sm:$0xff]
    %v1832 = vld [vmem:[%s5 + $0x1b8] sm:$0xff]
    %v1833 = vld [vmem:[%s5 + $0x1c0] sm:$0xff]
    %v1834 = vld [vmem:[%s5 + $0x1c8] sm:$0xff]
    %v1835 = vld [vmem:[%s5 + $0x1d0] sm:$0xff]
    %v1836 = vld [vmem:[%s5 + $0x1d8] sm:$0xff]
    %v1837 = vld [vmem:[%s5 + $0x1e0] sm:$0xff]
    %v1838 = vld [vmem:[%s5 + $0x1e8] sm:$0xff]
    %v1839 = vld [vmem:[%s5 + $0x1f0] sm:$0xff]
    %v1840 = vld [vmem:[%s5 + $0x1f8] sm:$0xff]
    %v1841 = vld [vmem:[%s6] sm:$0x3]
    %v1843 = vlaneseq
    %v1844 = vshrl.u32 %v1843, 7
    %v1845 = vsub.s32 0, %v1844
    %v1846 = vrot.slane %v1841, %v1845
    %v1847 = vlaneseq
    %v1848 = vshrl.u32 %v1847, 7
    %v1849 = vsub.s32 1, %v1848
    %v1850 = vrot.slane %v1841, %v1849
    %v1917 = vunpack.c.l.b16 %v1777
    %v1918 = vunpack.c.h.b16 %v1777
    %v1919 = vunpack.c.l.b16 %v1778
    %v1920 = vunpack.c.h.b16 %v1778
    %v1921 = vunpack.c.l.b16 %v1779
    %v1922 = vunpack.c.h.b16 %v1779
    %v1923 = vunpack.c.l.b16 %v1780
    %v1924 = vunpack.c.h.b16 %v1780
    %v1925 = vunpack.c.l.b16 %v1781
    %v1926 = vunpack.c.h.b16 %v1781
    %v1927 = vunpack.c.l.b16 %v1782
    %v1928 = vunpack.c.h.b16 %v1782
    %v1929 = vunpack.c.l.b16 %v1783
    %v1930 = vunpack.c.h.b16 %v1783
    %v1931 = vunpack.c.l.b16 %v1784
    %v1932 = vunpack.c.h.b16 %v1784
    %v1933 = vunpack.c.l.b16 %v1785
    %v1934 = vunpack.c.h.b16 %v1785
    %v1935 = vunpack.c.l.b16 %v1786
    %v1936 = vunpack.c.h.b16 %v1786
    %v1937 = vunpack.c.l.b16 %v1787
    %v1938 = vunpack.c.h.b16 %v1787
    %v1939 = vunpack.c.l.b16 %v1788
    %v1940 = vunpack.c.h.b16 %v1788
    %v1941 = vunpack.c.l.b16 %v1789
    %v1942 = vunpack.c.h.b16 %v1789
    %v1943 = vunpack.c.l.b16 %v1790
    %v1944 = vunpack.c.h.b16 %v1790
    %v1945 = vunpack.c.l.b16 %v1791
    %v1946 = vunpack.c.h.b16 %v1791
    %v1947 = vunpack.c.l.b16 %v1792
    %v1948 = vunpack.c.h.b16 %v1792
    %v1949 = vunpack.c.l.b16 %v1793
    %v1950 = vunpack.c.h.b16 %v1793
    %v1951 = vunpack.c.l.b16 %v1794
    %v1952 = vunpack.c.h.b16 %v1794
    %v1953 = vunpack.c.l.b16 %v1795
    %v1954 = vunpack.c.h.b16 %v1795
    %v1955 = vunpack.c.l.b16 %v1796
    %v1956 = vunpack.c.h.b16 %v1796
    %v1957 = vunpack.c.l.b16 %v1797
    %v1958 = vunpack.c.h.b16 %v1797
    %v1959 = vunpack.c.l.b16 %v1798
    %v1960 = vunpack.c.h.b16 %v1798
    %v1961 = vunpack.c.l.b16 %v1799
    %v1962 = vunpack.c.h.b16 %v1799
    %v1963 = vunpack.c.l.b16 %v1800
    %v1964 = vunpack.c.h.b16 %v1800
    %v1965 = vunpack.c.l.b16 %v1801
    %v1966 = vunpack.c.h.b16 %v1801
    %v1967 = vunpack.c.l.b16 %v1802
    %v1968 = vunpack.c.h.b16 %v1802
    %v1969 = vunpack.c.l.b16 %v1803
    %v1970 = vunpack.c.h.b16 %v1803
    %v1971 = vunpack.c.l.b16 %v1804
    %v1972 = vunpack.c.h.b16 %v1804
    %v1973 = vunpack.c.l.b16 %v1805
    %v1974 = vunpack.c.h.b16 %v1805
    %v1975 = vunpack.c.l.b16 %v1806
    %v1976 = vunpack.c.h.b16 %v1806
    %v1977 = vunpack.c.l.b16 %v1807
    %v1978 = vunpack.c.h.b16 %v1807
    %v1979 = vunpack.c.l.b16 %v1808
    %v1980 = vunpack.c.h.b16 %v1808
    %v1981 = vunpack.c.l.b16 %v1809
    %v1982 = vunpack.c.h.b16 %v1809
    %v1983 = vunpack.c.l.b16 %v1810
    %v1984 = vunpack.c.h.b16 %v1810
    %v1985 = vunpack.c.l.b16 %v1811
    %v1986 = vunpack.c.h.b16 %v1811
    %v1987 = vunpack.c.l.b16 %v1812
    %v1988 = vunpack.c.h.b16 %v1812
    %v1989 = vunpack.c.l.b16 %v1813
    %v1990 = vunpack.c.h.b16 %v1813
    %v1991 = vunpack.c.l.b16 %v1814
    %v1992 = vunpack.c.h.b16 %v1814
    %v1993 = vunpack.c.l.b16 %v1815
    %v1994 = vunpack.c.h.b16 %v1815
    %v1995 = vunpack.c.l.b16 %v1816
    %v1996 = vunpack.c.h.b16 %v1816
    %v1997 = vunpack.c.l.b16 %v1817
    %v1998 = vunpack.c.h.b16 %v1817
    %v1999 = vunpack.c.l.b16 %v1818
    %v2000 = vunpack.c.h.b16 %v1818
    %v2001 = vunpack.c.l.b16 %v1819
    %v2002 = vunpack.c.h.b16 %v1819
    %v2003 = vunpack.c.l.b16 %v1820
    %v2004 = vunpack.c.h.b16 %v1820
    %v2005 = vunpack.c.l.b16 %v1821
    %v2006 = vunpack.c.h.b16 %v1821
    %v2007 = vunpack.c.l.b16 %v1822
    %v2008 = vunpack.c.h.b16 %v1822
    %v2009 = vunpack.c.l.b16 %v1823
    %v2010 = vunpack.c.h.b16 %v1823
    %v2011 = vunpack.c.l.b16 %v1824
    %v2012 = vunpack.c.h.b16 %v1824
    %v2013 = vunpack.c.l.b16 %v1825
    %v2014 = vunpack.c.h.b16 %v1825
    %v2015 = vunpack.c.l.b16 %v1826
    %v2016 = vunpack.c.h.b16 %v1826
    %v2017 = vunpack.c.l.b16 %v1827
    %v2018 = vunpack.c.h.b16 %v1827
    %v2019 = vunpack.c.l.b16 %v1828
    %v2020 = vunpack.c.h.b16 %v1828
    %v2021 = vunpack.c.l.b16 %v1829
    %v2022 = vunpack.c.h.b16 %v1829
    %v2023 = vunpack.c.l.b16 %v1830
    %v2024 = vunpack.c.h.b16 %v1830
    %v2025 = vunpack.c.l.b16 %v1831
    %v2026 = vunpack.c.h.b16 %v1831
    %v2027 = vunpack.c.l.b16 %v1832
    %v2028 = vunpack.c.h.b16 %v1832
    %v2029 = vunpack.c.l.b16 %v1833
    %v2030 = vunpack.c.h.b16 %v1833
    %v2031 = vunpack.c.l.b16 %v1834
    %v2032 = vunpack.c.h.b16 %v1834
    %v2033 = vunpack.c.l.b16 %v1835
    %v2034 = vunpack.c.h.b16 %v1835
    %v2035 = vunpack.c.l.b16 %v1836
    %v2036 = vunpack.c.h.b16 %v1836
    %v2037 = vunpack.c.l.b16 %v1837
    %v2038 = vunpack.c.h.b16 %v1837
    %v2039 = vunpack.c.l.b16 %v1838
    %v2040 = vunpack.c.h.b16 %v1838
    %v2041 = vunpack.c.l.b16 %v1839
    %v2042 = vunpack.c.h.b16 %v1839
    %v2043 = vunpack.c.l.b16 %v1840
    %v2044 = vunpack.c.h.b16 %v1840
    %v2045 = vpack.c.b16 %v1919, %v1917
    %v2046 = vpack.c.b16 %v1920, %v1918
    %v2047 = vpack.c.b16 %v1923, %v1921
    %v2048 = vpack.c.b16 %v1924, %v1922
    %v2049 = vpack.c.b16 %v1927, %v1925
    %v2050 = vpack.c.b16 %v1928, %v1926
    %v2051 = vpack.c.b16 %v1931, %v1929
    %v2052 = vpack.c.b16 %v1932, %v1930
    %v2053 = vpack.c.b16 %v1935, %v1933
    %v2054 = vpack.c.b16 %v1936, %v1934
    %v2055 = vpack.c.b16 %v1939, %v1937
    %v2056 = vpack.c.b16 %v1940, %v1938
    %v2057 = vpack.c.b16 %v1943, %v1941
    %v2058 = vpack.c.b16 %v1944, %v1942
    %v2059 = vpack.c.b16 %v1947, %v1945
    %v2060 = vpack.c.b16 %v1948, %v1946
    %v2061 = vpack.c.b16 %v1951, %v1949
    %v2062 = vpack.c.b16 %v1952, %v1950
    %v2063 = vpack.c.b16 %v1955, %v1953
    %v2064 = vpack.c.b16 %v1956, %v1954
    %v2065 = vpack.c.b16 %v1959, %v1957
    %v2066 = vpack.c.b16 %v1960, %v1958
    %v2067 = vpack.c.b16 %v1963, %v1961
    %v2068 = vpack.c.b16 %v1964, %v1962
    %v2069 = vpack.c.b16 %v1967, %v1965
    %v2070 = vpack.c.b16 %v1968, %v1966
    %v2071 = vpack.c.b16 %v1971, %v1969
    %v2072 = vpack.c.b16 %v1972, %v1970
    %v2073 = vpack.c.b16 %v1975, %v1973
    %v2074 = vpack.c.b16 %v1976, %v1974
    %v2075 = vpack.c.b16 %v1979, %v1977
    %v2076 = vpack.c.b16 %v1980, %v1978
    %v2077 = vpack.c.b16 %v1983, %v1981
    %v2078 = vpack.c.b16 %v1984, %v1982
    %v2079 = vpack.c.b16 %v1987, %v1985
    %v2080 = vpack.c.b16 %v1988, %v1986
    %v2081 = vpack.c.b16 %v1991, %v1989
    %v2082 = vpack.c.b16 %v1992, %v1990
    %v2083 = vpack.c.b16 %v1995, %v1993
    %v2084 = vpack.c.b16 %v1996, %v1994
    %v2085 = vpack.c.b16 %v1999, %v1997
    %v2086 = vpack.c.b16 %v2000, %v1998
    %v2087 = vpack.c.b16 %v2003, %v2001
    %v2088 = vpack.c.b16 %v2004, %v2002
    %v2089 = vpack.c.b16 %v2007, %v2005
    %v2090 = vpack.c.b16 %v2008, %v2006
    %v2091 = vpack.c.b16 %v2011, %v2009
    %v2092 = vpack.c.b16 %v2012, %v2010
    %v2093 = vpack.c.b16 %v2015, %v2013
    %v2094 = vpack.c.b16 %v2016, %v2014
    %v2095 = vpack.c.b16 %v2019, %v2017
    %v2096 = vpack.c.b16 %v2020, %v2018
    %v2097 = vpack.c.b16 %v2023, %v2021
    %v2098 = vpack.c.b16 %v2024, %v2022
    %v2099 = vpack.c.b16 %v2027, %v2025
    %v2100 = vpack.c.b16 %v2028, %v2026
    %v2101 = vpack.c.b16 %v2031, %v2029
    %v2102 = vpack.c.b16 %v2032, %v2030
    %v2103 = vpack.c.b16 %v2035, %v2033
    %v2104 = vpack.c.b16 %v2036, %v2034
    %v2105 = vpack.c.b16 %v2039, %v2037
    %v2106 = vpack.c.b16 %v2040, %v2038
    %v2107 = vpack.c.b16 %v2043, %v2041
    %v2108 = vpack.c.b16 %v2044, %v2042
    %2173 = vmatprep.subr.bf16.mxu0 %v2060
    %2174 = vmatpush1.bf16.msra.mxu0 %v2059
    %2175 = vmatprep.subr.bf16.mxu0 %v2058
    %2176 = vmatpush1.bf16.msra.mxu0 %v2057
    %2177 = vmatprep.subr.bf16.mxu0 %v2056
    %2178 = vmatpush1.bf16.msra.mxu0 %v2055
    %2179 = vmatprep.subr.bf16.mxu0 %v2054
    %2180 = vmatpush1.bf16.msra.mxu0 %v2053
    %2181 = vmatprep.subr.bf16.mxu0 %v2052
    %2182 = vmatpush1.bf16.msra.mxu0 %v2051
    %2183 = vmatprep.subr.bf16.mxu0 %v2050
    %2184 = vmatpush1.bf16.msra.mxu0 %v2049
    %2185 = vmatprep.subr.bf16.mxu0 %v2048
    %2186 = vmatpush1.bf16.msra.mxu0 %v2047
    %2187 = vmatprep.subr.bf16.mxu0 %v2046
    %2188 = vmatpush1.bf16.msra.mxu0 %v2045
    %2189 = vmatprep.subr.bf16.mxu0 %v2076
    %2190 = vmatpush2.bf16.msra.mxu0 %v2075
    %2191 = vmatprep.subr.bf16.mxu0 %v2074
    %2192 = vmatpush2.bf16.msra.mxu0 %v2073
    %2193 = vmatprep.subr.bf16.mxu0 %v2072
    %2194 = vmatpush2.bf16.msra.mxu0 %v2071
    %2195 = vmatprep.subr.bf16.mxu0 %v2070
    %2196 = vmatpush2.bf16.msra.mxu0 %v2069
    %2197 = vmatprep.subr.bf16.mxu0 %v2068
    %2198 = vmatpush2.bf16.msra.mxu0 %v2067
    %2199 = vmatprep.subr.bf16.mxu0 %v2066
    %2200 = vmatpush2.bf16.msra.mxu0 %v2065
    %2201 = vmatprep.subr.bf16.mxu0 %v2064
    %2202 = vmatpush2.bf16.msra.mxu0 %v2063
    %2203 = vmatprep.subr.bf16.mxu0 %v2062
    %2204 = vmatpush2.bf16.msra.mxu0 %v2061
    %2205 = vmatprep.mubr.bf16.mxu0 %v1774
    %2206 = vmatmul.mubr.bf16.gmra.mxu0 %v1773
    %v2207 = vpop.f32.mrf.mxu0
    %v2208 = vadd.f32 %v1846, %v2207
    %v2209 = vpop.f32.mrf.mxu0
    %v2210 = vadd.f32 %v1850, %v2209
    %v2211 = vpop.f32.mrf.mxu0
    %v2212 = vadd.f32 %v1846, %v2211
    %v2213 = vpop.f32.mrf.mxu0
    %v2214 = vadd.f32 %v1850, %v2213
    %2215 = vdwg.mxu0
    %2216 = vmatprep.subr.bf16.mxu0 %v2092
    %2217 = vmatpush1.bf16.msra.mxu0 %v2091
    %2218 = vmatprep.subr.bf16.mxu0 %v2090
    %2219 = vmatpush1.bf16.msra.mxu0 %v2089
    %2220 = vmatprep.subr.bf16.mxu0 %v2088
    %2221 = vmatpush1.bf16.msra.mxu0 %v2087
    %2222 = vmatprep.subr.bf16.mxu0 %v2086
    %2223 = vmatpush1.bf16.msra.mxu0 %v2085
    %2224 = vmatprep.subr.bf16.mxu0 %v2084
    %2225 = vmatpush1.bf16.msra.mxu0 %v2083
    %2226 = vmatprep.subr.bf16.mxu0 %v2082
    %2227 = vmatpush1.bf16.msra.mxu0 %v2081
    %2228 = vmatprep.subr.bf16.mxu0 %v2080
    %2229 = vmatpush1.bf16.msra.mxu0 %v2079
    %2230 = vmatprep.subr.bf16.mxu0 %v2078
    %2231 = vmatpush1.bf16.msra.mxu0 %v2077
    %2232 = vmatprep.subr.bf16.mxu0 %v2108
    %2233 = vmatpush2.bf16.msra.mxu0 %v2107
    %2234 = vmatprep.subr.bf16.mxu0 %v2106
    %2235 = vmatpush2.bf16.msra.mxu0 %v2105
    %2236 = vmatprep.subr.bf16.mxu0 %v2104
    %2237 = vmatpush2.bf16.msra.mxu0 %v2103
    %2238 = vmatprep.subr.bf16.mxu0 %v2102
    %2239 = vmatpush2.bf16.msra.mxu0 %v2101
    %2240 = vmatprep.subr.bf16.mxu0 %v2100
    %2241 = vmatpush2.bf16.msra.mxu0 %v2099
    %2242 = vmatprep.subr.bf16.mxu0 %v2098
    %2243 = vmatpush2.bf16.msra.mxu0 %v2097
    %2244 = vmatprep.subr.bf16.mxu0 %v2096
    %2245 = vmatpush2.bf16.msra.mxu0 %v2095
    %2246 = vmatprep.subr.bf16.mxu0 %v2094
    %2247 = vmatpush2.bf16.msra.mxu0 %v2093
    %2248 = vmatprep.mubr.bf16.mxu0 %v1776
    %2249 = vmatmul.mubr.bf16.gmra.mxu0 %v1775
    %v2250 = vpop.f32.mrf.mxu0
    %v2251 = vadd.f32 %v2208, %v2250
    %v2252 = vpop.f32.mrf.mxu0
    %v2253 = vadd.f32 %v2210, %v2252
    %v2254 = vpop.f32.mrf.mxu0
    %v2255 = vadd.f32 %v2212, %v2254
    %v2256 = vpop.f32.mrf.mxu0
    %v2257 = vadd.f32 %v2214, %v2256
    %2258 = vdwg.mxu0
    %vm2259 = vcmp.gt.f32.partialorder %v2251, 0.0
    %vm2260 = vcmp.gt.f32.partialorder %v2253, 0.0
    %vm2261 = vcmp.gt.f32.partialorder %v2255, 0.0
    %vm2262 = vcmp.gt.f32.partialorder %v2257, 0.0
    %v2263 = vmul.f32 %v2251, 0.2
    %v2264 = vmul.f32 %v2253, 0.2
    %v2265 = vmul.f32 %v2255, 0.2
    %v2266 = vmul.f32 %v2257, 0.2
    %v2267 = vsel %vm2259, %v2251, %v2263
    %v2268 = vsel %vm2260, %v2253, %v2264
    %v2269 = vsel %vm2261, %v2255, %v2265
    %v2270 = vsel %vm2262, %v2257, %v2266
    %v2271 = vld [vmem:[%s7] sm:$0x3]
    %v2273 = vlaneseq
    %v2274 = vshrl.u32 %v2273, 7
    %v2275 = vsub.s32 0, %v2274
    %v2276 = vrot.slane %v2271, %v2275
    %v2277 = vlaneseq
    %v2278 = vshrl.u32 %v2277, 7
    %v2279 = vsub.s32 1, %v2278
    %v2280 = vrot.slane %v2271, %v2279
    %v2283 = vmul.f32 %v2267, %v2276
    %v2284 = vmul.f32 %v2268, %v2280
    %v2285 = vmul.f32 %v2269, %v2276
    %v2286 = vmul.f32 %v2270, %v2280
    %v2287 = vadd.f32 %v2283, %v2284
    %2288 = vadd.xlane.f32.xlu0 %v2287
    %v2289 = vpop.xlane.xlu0 %2288
    %v2290 = vadd.f32 %v2285, %v2286
    %2291 = vadd.xlane.f32.xlu0 %v2290
    %v2292 = vpop.xlane.xlu0 %2291
    %s2293 = sld [smem:[#allocation2]]
    %v2294 = vstv %s2293
    %v2295 = vadd.f32 %v2289, %v2294
    %v2296 = vadd.f32 %v2292, %v2294
    %v2297 = vxor.u32 %v2295, 2147483648
    %v2298 = vxor.u32 %v2296, 2147483648
    %v2299 = vmul.f32 %v2297, 1.442695
    %v2300 = vpow.pop %v2299
    %v2301 = vmul.f32 %v2298, 1.442695
    %v2302 = vpow.pop %v2301
    %v2303 = vadd.f32 %v2300, 1.0
    %v2304 = vadd.f32 %v2302, 1.0
    %v2305 = vrcp.pop %v2303
    %v2306 = vmul.f32 1.0, %v2305
    %v2307 = vrcp.pop %v2304
    %v2308 = vmul.f32 1.0, %v2307
    %vm2309 = vcmask 7168
    %2310 = vst.msk [vmem:[%s9] sm:$0xff] %vm2309, %v2306
    %2311 = vst.msk [vmem:[%s9 + $0x8] sm:$0xff] %vm2309, %v2308
    // Predicated region
    $region42: #{discriminator_forward.1} parent=1 // pred_check
      _
    $region43: #{discriminator_forward.1} parent=1 // pred_check_branch
      %2313 = sbr.rel (0) target = $region45
    $region44: #{discriminator_forward.1} parent=1 // pred_region
      _
    $region45: #{discriminator_forward.1} parent=1 // pred_fallthru
      _
    // Predicated region
    $region46: #{discriminator_forward.1} parent=1 // pred_check
      _
    $region47: #{discriminator_forward.1} parent=1 // pred_check_branch
      %2315 = sbr.rel (0) target = $region49
    $region48: #{discriminator_forward.1} parent=1 // pred_region
      _
    $region49: #{discriminator_forward.1} parent=1 // pred_fallthru
      _
    %2316 = vsyncpa [#allocation4], 1

</llo_original>
